<compile_context>
chip_gen: v7x
topology: tpu7x:2x2x1
jax: 0.10.0
libtpu: 0.0.40
codegen_flags: <defaults>
</compile_context>

<pallas_src>
import jax
import jax.numpy as jnp
from jax import lax
from jax.experimental import pallas as pl
from jax.experimental.pallas import tpu as pltpu


# ---------------------------------------------------------------------------
# Pallas kernel: full GinModel forward (2x GINConv MLP + ReLU + BN, mean pool)
# grid = (phase, node-row tile); phase 0 = conv1+BN1, phase 1 = conv2+BN2+pool
# ---------------------------------------------------------------------------
def gin_forward_kernel(
    x_ref, a_ref,
    w1a_ref, b1a_ref, w1b_ref, b1b_ref, g1_ref, be1_ref,
    w2a_ref, b2a_ref, w2b_ref, b2b_ref, g2_ref, be2_ref,
    p_ref, invc_ref,
    out_ref,
    xw1_s, h1_s, h2_s, s1_s, q1_s, s2_s, q2_s,
):
    bn_eps = 1e-5
    ph = pl.program_id(0)
    t = pl.program_id(1)
    n_tiles = pl.num_programs(1)
    tm = a_ref.shape[0]
    inv_n = 1.0 / h1_s.shape[0]                 # true node count (no row padding)
    row0 = pl.multiple_of(t * tm, tm)

    @pl.when((ph == 0) & (t == 0))
    def _init():
        # Reassociated conv1 projection: xw1 = x @ W1a (done once, tiny K=F matmul).
        xw1_s[...] = jnp.dot(x_ref[...].astype(jnp.bfloat16), w1a_ref[...],
                             preferred_element_type=jnp.float32)
        s1_s[...] = jnp.zeros_like(s1_s)
        q1_s[...] = jnp.zeros_like(q1_s)
        s2_s[...] = jnp.zeros_like(s2_s)
        q2_s[...] = jnp.zeros_like(q2_s)

    a_tile = a_ref[...]                         # bf16 [tm, N], self-loop folded in

    @pl.when(ph == 0)
    def _conv1():
        # nn1((A+I) @ x) on this row tile == (A+I) @ (x @ W1a) + b1a -> ReLU -> W1b
        g = jnp.dot(a_tile, xw1_s[...].astype(jnp.bfloat16),
                    preferred_element_type=jnp.float32) + b1a_ref[...]
        g = jnp.maximum(g, 0.0)                 # ReLU inside nn1
        h = jnp.dot(g.astype(jnp.bfloat16), w1b_ref[...],
                    preferred_element_type=jnp.float32) + b1b_ref[...]
        h = jnp.maximum(h, 0.0)                 # F.relu(conv1(...))
        h1_s[pl.ds(row0, tm), :] = h
        s1_s[...] += jnp.sum(h, axis=0, keepdims=True)
        q1_s[...] += jnp.sum(h * h, axis=0, keepdims=True)

    @pl.when((ph == 0) & (t == n_tiles - 1))
    def _bn1_finalize():
        mean = s1_s[...] * inv_n
        var = jnp.maximum(q1_s[...] * inv_n - mean * mean, 0.0)   # clamp: no NaN
        scale = g1_ref[...] * lax.rsqrt(var + bn_eps)
        shift = be1_ref[...] - mean * scale
        h1_s[...] = h1_s[...] * scale + shift                      # BN1 in place

    @pl.when(ph == 1)
    def _conv2():
        agg = jnp.dot(a_tile, h1_s[...].astype(jnp.bfloat16),
                      preferred_element_type=jnp.float32)
        g = jnp.dot(agg.astype(jnp.bfloat16), w2a_ref[...],
                    preferred_element_type=jnp.float32) + b2a_ref[...]
        g = jnp.maximum(g, 0.0)                 # ReLU inside nn2
        h = jnp.dot(g.astype(jnp.bfloat16), w2b_ref[...],
                    preferred_element_type=jnp.float32) + b2b_ref[...]
        h = jnp.maximum(h, 0.0)                 # F.relu(conv2(...))
        h2_s[pl.ds(row0, tm), :] = h
        s2_s[...] += jnp.sum(h, axis=0, keepdims=True)
        q2_s[...] += jnp.sum(h * h, axis=0, keepdims=True)

    @pl.when((ph == 1) & (t == n_tiles - 1))
    def _bn2_pool_finalize():
        mean = s2_s[...] * inv_n
        var = jnp.maximum(q2_s[...] * inv_n - mean * mean, 0.0)
        scale = g2_ref[...] * lax.rsqrt(var + bn_eps)
        shift = be2_ref[...] - mean * scale
        h2bn = h2_s[...] * scale + shift
        # global_mean_pool: 0/1 one-hot matmul, then per-graph 1/count scale.
        pooled = jnp.dot(p_ref[...], h2bn.astype(jnp.bfloat16),
                         preferred_element_type=jnp.float32)
        out_ref[...] = pooled * invc_ref[...]


# ---------------------------------------------------------------------------
# Host wrapper: edge masking, adjacency / pooling construction, padding, call
# ---------------------------------------------------------------------------
def _round_up(v, m):
    return ((v + m - 1) // m) * m


def _pad2(a, rows, cols):
    return jnp.pad(a, ((0, rows - a.shape[0]), (0, cols - a.shape[1])))


def _pick_row_tile(n):
    # Largest "nice" row-tile that divides N; falls back to a single tile.
    for cand in (512, 256, 128):
        if n > cand and n % cand == 0:
            return cand
    return n


def gin_model_forward(x, edge_index, batch, num_graphs, params):
    N, F = x.shape
    E = edge_index.shape[1]
    G = num_graphs

    (w1a, b1a, w1b, b1b, g1, be1, w2a, b2a, w2b, b2b, g2, be2) = params
    dim1, dim2, embed_dim = w1a.shape[1], w1b.shape[1], w2b.shape[1]

    LANE = 128
    Fp, d1p, d2p, ep = (_round_up(d, LANE) for d in (F, dim1, dim2, embed_dim))

    # Edge mask (reproduces GinModel.forward masking semantics).
    thresh = jnp.repeat(jnp.arange(G), E // G).astype(jnp.float32) * (N / G)
    valid = jnp.all(edge_index.astype(jnp.float32) - thresh[None, :] >= 0.0, axis=0)

    # Dense adjacency built directly in bf16 (counts are small integers: exact),
    # GIN self-loop (eps=0) folded in via diagonal indices in the same scatter.
    diag = jnp.arange(N, dtype=edge_index.dtype)
    dst = jnp.concatenate([edge_index[1], diag])
    src = jnp.concatenate([edge_index[0], diag])
    vals = jnp.concatenate([valid.astype(jnp.bfloat16), jnp.ones((N,), jnp.bfloat16)])
    A = jnp.zeros((N, N), jnp.bfloat16).at[dst, src].add(vals)

    # Pooling: exact 0/1 bf16 one-hot; 1/count applied post-matmul in the kernel.
    onehot = batch[None, :] == jnp.arange(G)[:, None]                    # [G, N]
    Pone = onehot.astype(jnp.bfloat16)
    inv_cnt = 1.0 / jnp.maximum(
        jnp.sum(onehot, axis=1, keepdims=True).astype(jnp.float32), 1.0)  # [G, 1]

    # Lane-dense (128-wide) zero padding of features / weights / BN params.
    xp = _pad2(x.astype(jnp.float32), N, Fp)
    w1a_p = _pad2(w1a, Fp, d1p).astype(jnp.bfloat16)
    b1a_p = _pad2(b1a, 1, d1p)
    w1b_p = _pad2(w1b, d1p, d2p).astype(jnp.bfloat16)
    b1b_p = _pad2(b1b, 1, d2p)
    g1_p, be1_p = _pad2(g1, 1, d2p), _pad2(be1, 1, d2p)
    w2a_p = _pad2(w2a, d2p, d2p).astype(jnp.bfloat16)
    b2a_p = _pad2(b2a, 1, d2p)
    w2b_p = _pad2(w2b, d2p, ep).astype(jnp.bfloat16)
    b2b_p = _pad2(b2b, 1, ep)
    g2_p, be2_p = _pad2(g2, 1, ep), _pad2(be2, 1, ep)

    tm = _pick_row_tile(N)
    n_tiles = N // tm

    # VMEM budget from actual tensor bytes (not the full physical VMEM).
    weight_bytes = 2 * (Fp * d1p + d1p * d2p + d2p * d2p + d2p * ep)
    scratch_bytes = 4 * N * (d1p + d2p + ep) + 4 * 4 * 8 * LANE
    small_bytes = 12 * 4 * 8 * LANE + 2 * G * N + 4 * 8 * G + 4 * G * ep
    stream_bytes = 2 * 2 * tm * N                     # double-buffered A row tile
    needed = 4 * N * Fp + weight_bytes + scratch_bytes + small_bytes + stream_bytes
    try:
        vmem_cap = pltpu.get_tpu_info().vmem_capacity_bytes
    except Exception:
        vmem_cap = 64 * 1024 * 1024                   # conservative (v7x) fallback
    vmem_limit = int(min(max(4 * needed, 16 * 1024 * 1024), 0.75 * vmem_cap))

    flops = (2 * N * Fp * d1p + 2 * N * N * d1p + 2 * N * d1p * d2p
             + 2 * N * N * d2p + 2 * N * d2p * d2p + 2 * N * d2p * ep
             + 2 * G * N * ep)
    bytes_accessed = (2 * 2 * N * N + 4 * N * Fp + weight_bytes
                      + 2 * G * N + 4 * G * ep)

    full = lambda ph, t: (0, 0)
    grid_spec = pltpu.PrefetchScalarGridSpec(
        num_scalar_prefetch=0,
        grid=(2, n_tiles),                            # (phase, node-row tile)
        in_specs=[
            pl.BlockSpec((N, Fp), full),                        # x
            pl.BlockSpec((tm, N), lambda ph, t: (t, 0)),        # A row tile (streamed)
            pl.BlockSpec((Fp, d1p), full), pl.BlockSpec((1, d1p), full),
            pl.BlockSpec((d1p, d2p), full), pl.BlockSpec((1, d2p), full),
            pl.BlockSpec((1, d2p), full), pl.BlockSpec((1, d2p), full),
            pl.BlockSpec((d2p, d2p), full), pl.BlockSpec((1, d2p), full),
            pl.BlockSpec((d2p, ep), full), pl.BlockSpec((1, ep), full),
            pl.BlockSpec((1, ep), full), pl.BlockSpec((1, ep), full),
            pl.BlockSpec((G, N), full),                         # 0/1 pooling one-hot
            pl.BlockSpec((G, 1), full),                         # 1/count per graph
        ],
        out_specs=pl.BlockSpec((G, ep), full),
        scratch_shapes=[
            pltpu.VMEM((N, d1p), jnp.float32),   # xw1 = x @ W1a
            pltpu.VMEM((N, d2p), jnp.float32),   # h1 (pre-BN), then BN1'd in place
            pltpu.VMEM((N, ep), jnp.float32),    # h2 (pre-BN)
            pltpu.VMEM((1, d2p), jnp.float32),   # BN1 sum
            pltpu.VMEM((1, d2p), jnp.float32),   # BN1 sum of squares
            pltpu.VMEM((1, ep), jnp.float32),    # BN2 sum
            pltpu.VMEM((1, ep), jnp.float32),    # BN2 sum of squares
        ],
    )

    out_pad = pl.pallas_call(
        gin_forward_kernel,
        out_shape=jax.ShapeDtypeStruct((G, ep), jnp.float32),
        grid_spec=grid_spec,
        compiler_params=pltpu.CompilerParams(
            # BN stats accumulate across row tiles -> reduction-like axes.
            dimension_semantics=("arbitrary", "arbitrary"),
            vmem_limit_bytes=vmem_limit,
        ),
        cost_estimate=pl.CostEstimate(
            flops=flops,
            transcendentals=d2p + ep,            # the two BN rsqrt rows
            bytes_accessed=bytes_accessed,
        ),
    )(xp, A, w1a_p, b1a_p, w1b_p, b1b_p, g1_p, be1_p,
      w2a_p, b2a_p, w2b_p, b2b_p, g2_p, be2_p, Pone, inv_cnt)

    return out_pad[:, :embed_dim]


# ---------------------------------------------------------------------------
# Deterministic parameter init (shapes from GinModel.__init__)
# ---------------------------------------------------------------------------
def init_linear(key, fan_in, fan_out):
    kw, kb = jax.random.split(key)
    bound = 1.0 / (fan_in ** 0.5)
    W = jax.random.uniform(kw, (fan_in, fan_out), jnp.float32, -bound, bound)
    b = jax.random.uniform(kb, (1, fan_out), jnp.float32, -bound, bound)
    return W, b


def init_params(key, num_features, dim1=32, dim2=64, embed_dim=64):
    k1, k2, k3, k4 = jax.random.split(key, 4)
    w1a, b1a = init_linear(k1, num_features, dim1)
    w1b, b1b = init_linear(k2, dim1, dim2)
    g1 = jnp.ones((1, dim2), jnp.float32)
    be1 = jnp.zeros((1, dim2), jnp.float32)
    w2a, b2a = init_linear(k3, dim2, dim2)
    w2b, b2b = init_linear(k4, dim2, embed_dim)
    g2 = jnp.ones((1, embed_dim), jnp.float32)
    be2 = jnp.zeros((1, embed_dim), jnp.float32)
    return (w1a, b1a, w1b, b1b, g1, be1, w2a, b2a, w2b, b2b, g2, be2)


if __name__ == "__main__":
    key = jax.random.PRNGKey(0)
    kx, ke1, ke2, ke3, ke4, kp = jax.random.split(key, 6)

    # Small synthetic graph batch: 2 graphs x 8 nodes, 8 features, 16 edges/graph.
    num_features = 8
    N, G, E = 16, 2, 32
    per_graph = N // G
    epg = E // G

    x = jax.random.normal(kx, (N, num_features), jnp.float32)
    src0 = jax.random.randint(ke1, (epg,), 0, per_graph)
    dst0 = jax.random.randint(ke2, (epg,), 0, per_graph)
    src1 = jax.random.randint(ke3, (epg,), 0, per_graph) + per_graph
    dst1 = jax.random.randint(ke4, (epg,), 0, per_graph) + per_graph
    # One deliberately "invalid" edge in graph-1's slot pointing at a graph-0
    # node, so the edge-mask filter actually removes something.
    src1 = src1.at[0].set(0)
    edge_index = jnp.stack(
        [jnp.concatenate([src0, src1]), jnp.concatenate([dst0, dst1])]
    ).astype(jnp.int32)
    batch = jnp.repeat(jnp.arange(G), per_graph).astype(jnp.int32)

    params = init_params(kp, num_features, dim1=32, dim2=64, embed_dim=64)

    out = gin_model_forward(x, edge_index, batch, G, params)
    out = jax.block_until_ready(out)

    assert out.shape == (G, 64)
    assert bool(jnp.all(jnp.isfinite(out)))
    print("KERNEL_OK")
</pallas_src>

<mosaic_0001>
module attributes {stable_mosaic.version = 11 : i64} {
  func.func @gin_forward_kernel(%arg0: i32, %arg1: i32, %arg2: memref<16x128xf32, #tpu.memory_space<vmem>>, %arg3: memref<16x16xbf16, #tpu.memory_space<vmem>>, %arg4: memref<128x128xbf16, #tpu.memory_space<vmem>>, %arg5: memref<1x128xf32, #tpu.memory_space<vmem>>, %arg6: memref<128x128xbf16, #tpu.memory_space<vmem>>, %arg7: memref<1x128xf32, #tpu.memory_space<vmem>>, %arg8: memref<1x128xf32, #tpu.memory_space<vmem>>, %arg9: memref<1x128xf32, #tpu.memory_space<vmem>>, %arg10: memref<128x128xbf16, #tpu.memory_space<vmem>>, %arg11: memref<1x128xf32, #tpu.memory_space<vmem>>, %arg12: memref<128x128xbf16, #tpu.memory_space<vmem>>, %arg13: memref<1x128xf32, #tpu.memory_space<vmem>>, %arg14: memref<1x128xf32, #tpu.memory_space<vmem>>, %arg15: memref<1x128xf32, #tpu.memory_space<vmem>>, %arg16: memref<2x16xbf16, #tpu.memory_space<vmem>>, %arg17: memref<2x1xf32, #tpu.memory_space<vmem>>, %arg18: memref<2x128xf32, #tpu.memory_space<vmem>>, %arg19: memref<16x128xf32, #tpu.memory_space<vmem>>, %arg20: memref<16x128xf32, #tpu.memory_space<vmem>>, %arg21: memref<16x128xf32, #tpu.memory_space<vmem>>, %arg22: memref<1x128xf32, #tpu.memory_space<vmem>>, %arg23: memref<1x128xf32, #tpu.memory_space<vmem>>, %arg24: memref<1x128xf32, #tpu.memory_space<vmem>>, %arg25: memref<1x128xf32, #tpu.memory_space<vmem>>) attributes {dimension_semantics = [#tpu.dimension_semantics<arbitrary>, #tpu.dimension_semantics<arbitrary>], iteration_bounds = array<i64: 2, 1>, scalar_prefetch = 0 : i64, scratch_operands = 7 : i64, tpu.core_type = #tpu.core_type<tc>, window_params = [{pipeline_mode = #tpu.pipeline_mode<synchronous>, transform_indices = @transform_0, window_bounds = array<i64: 16, 128>}, {transform_indices = @transform_1, window_bounds = array<i64: 16, 16>}, {pipeline_mode = #tpu.pipeline_mode<synchronous>, transform_indices = @transform_2, window_bounds = array<i64: 128, 128>}, {pipeline_mode = #tpu.pipeline_mode<synchronous>, transform_indices = @transform_3, window_bounds = array<i64: 1, 128>}, {pipeline_mode = #tpu.pipeline_mode<synchronous>, transform_indices = @transform_4, window_bounds = array<i64: 128, 128>}, {pipeline_mode = #tpu.pipeline_mode<synchronous>, transform_indices = @transform_5, window_bounds = array<i64: 1, 128>}, {pipeline_mode = #tpu.pipeline_mode<synchronous>, transform_indices = @transform_6, window_bounds = array<i64: 1, 128>}, {pipeline_mode = #tpu.pipeline_mode<synchronous>, transform_indices = @transform_7, window_bounds = array<i64: 1, 128>}, {pipeline_mode = #tpu.pipeline_mode<synchronous>, transform_indices = @transform_8, window_bounds = array<i64: 128, 128>}, {pipeline_mode = #tpu.pipeline_mode<synchronous>, transform_indices = @transform_9, window_bounds = array<i64: 1, 128>}, {pipeline_mode = #tpu.pipeline_mode<synchronous>, transform_indices = @transform_10, window_bounds = array<i64: 128, 128>}, {pipeline_mode = #tpu.pipeline_mode<synchronous>, transform_indices = @transform_11, window_bounds = array<i64: 1, 128>}, {pipeline_mode = #tpu.pipeline_mode<synchronous>, transform_indices = @transform_12, window_bounds = array<i64: 1, 128>}, {pipeline_mode = #tpu.pipeline_mode<synchronous>, transform_indices = @transform_13, window_bounds = array<i64: 1, 128>}, {pipeline_mode = #tpu.pipeline_mode<synchronous>, transform_indices = @transform_14, window_bounds = array<i64: 2, 16>}, {pipeline_mode = #tpu.pipeline_mode<synchronous>, transform_indices = @transform_15, window_bounds = array<i64: 2, 1>}, {pipeline_mode = #tpu.pipeline_mode<synchronous>, transform_indices = @transform_16, window_bounds = array<i64: 2, 128>}]} {
    %c16_i32 = arith.constant 16 : i32
    %0 = arith.muli %arg1, %c16_i32 : i32
    %1 = tpu.assume_multiple %0, 16 : i32
    %c0_i32 = arith.constant 0 : i32
    %2 = arith.cmpi eq, %arg0, %c0_i32 : i32
    %c0_i32_0 = arith.constant 0 : i32
    %3 = arith.cmpi eq, %arg1, %c0_i32_0 : i32
    %4 = arith.andi %2, %3 : i1
    %5 = arith.extui %4 : i1 to i32
    %c0_i32_1 = arith.constant 0 : i32
    %6 = arith.cmpi ne, %5, %c0_i32_1 : i32
    scf.if %6 {
      %c0_12 = arith.constant 0 : index
      %c0_13 = arith.constant 0 : index
      %24 = vector.load %arg2[%c0_12, %c0_13] : memref<16x128xf32, #tpu.memory_space<vmem>>, vector<16x128xf32>
      %25 = arith.truncf %24 : vector<16x128xf32> to vector<16x128xbf16>
      %c0_14 = arith.constant 0 : index
      %c0_15 = arith.constant 0 : index
      %26 = vector.load %arg4[%c0_14, %c0_15] : memref<128x128xbf16, #tpu.memory_space<vmem>>, vector<128x128xbf16>
      %cst = arith.constant dense<0.000000e+00> : vector<16x128xf32>
      %27 = tpu.matmul %25, %26, %cst {dimension_numbers = #tpu.dot_dimension_numbers<[1], [0], [0], [1], [0, 0, 1, 1], [], []>} : vector<16x128xbf16>, vector<128x128xbf16>, vector<16x128xf32> -> vector<16x128xf32>
      %c0_16 = arith.constant 0 : index
      %c0_17 = arith.constant 0 : index
      %28 = vector.load %arg19[%c0_16, %c0_17] : memref<16x128xf32, #tpu.memory_space<vmem>>, vector<16x128xf32>
      tpu.vector_store %arg19[%c0_16, %c0_17], %27 {strides = array<i32>} : memref<16x128xf32, #tpu.memory_space<vmem>>, vector<16x128xf32>,
      %cst_18 = arith.constant 0.000000e+00 : f32
      %29 = vector.broadcast %cst_18 : f32 to vector<1x128xf32>
      %c0_19 = arith.constant 0 : index
      %c0_20 = arith.constant 0 : index
      %30 = vector.load %arg22[%c0_19, %c0_20] : memref<1x128xf32, #tpu.memory_space<vmem>>, vector<1x128xf32>
      tpu.vector_store %arg22[%c0_19, %c0_20], %29 {strides = array<i32>} : memref<1x128xf32, #tpu.memory_space<vmem>>, vector<1x128xf32>,
      %cst_21 = arith.constant 0.000000e+00 : f32
      %31 = vector.broadcast %cst_21 : f32 to vector<1x128xf32>
      %c0_22 = arith.constant 0 : index
      %c0_23 = arith.constant 0 : index
      %32 = vector.load %arg23[%c0_22, %c0_23] : memref<1x128xf32, #tpu.memory_space<vmem>>, vector<1x128xf32>
      tpu.vector_store %arg23[%c0_22, %c0_23], %31 {strides = array<i32>} : memref<1x128xf32, #tpu.memory_space<vmem>>, vector<1x128xf32>,
      %cst_24 = arith.constant 0.000000e+00 : f32
      %33 = vector.broadcast %cst_24 : f32 to vector<1x128xf32>
      %c0_25 = arith.constant 0 : index
      %c0_26 = arith.constant 0 : index
      %34 = vector.load %arg24[%c0_25, %c0_26] : memref<1x128xf32, #tpu.memory_space<vmem>>, vector<1x128xf32>
      tpu.vector_store %arg24[%c0_25, %c0_26], %33 {strides = array<i32>} : memref<1x128xf32, #tpu.memory_space<vmem>>, vector<1x128xf32>,
      %cst_27 = arith.constant 0.000000e+00 : f32
      %35 = vector.broadcast %cst_27 : f32 to vector<1x128xf32>
      %c0_28 = arith.constant 0 : index
      %c0_29 = arith.constant 0 : index
      %36 = vector.load %arg25[%c0_28, %c0_29] : memref<1x128xf32, #tpu.memory_space<vmem>>, vector<1x128xf32>
      tpu.vector_store %arg25[%c0_28, %c0_29], %35 {strides = array<i32>} : memref<1x128xf32, #tpu.memory_space<vmem>>, vector<1x128xf32>,
    } else {
    }
    %c0 = arith.constant 0 : index
    %c0_2 = arith.constant 0 : index
    %7 = vector.load %arg3[%c0, %c0_2] : memref<16x16xbf16, #tpu.memory_space<vmem>>, vector<16x16xbf16>
    %c0_i32_3 = arith.constant 0 : i32
    %8 = arith.cmpi eq, %arg0, %c0_i32_3 : i32
    %9 = arith.extui %8 : i1 to i32
    %c0_i32_4 = arith.constant 0 : i32
    %10 = arith.cmpi ne, %9, %c0_i32_4 : i32
    scf.if %10 {
      %c0_12 = arith.constant 0 : index
      %c0_13 = arith.constant 0 : index
      %24 = vector.load %arg19[%c0_12, %c0_13] : memref<16x128xf32, #tpu.memory_space<vmem>>, vector<16x128xf32>
      %25 = arith.truncf %24 : vector<16x128xf32> to vector<16x128xbf16>
      %cst = arith.constant dense<0.000000e+00> : vector<16x128xf32>
      %26 = tpu.matmul %7, %25, %cst {dimension_numbers = #tpu.dot_dimension_numbers<[1], [0], [0], [1], [0, 0, 1, 1], [], []>} : vector<16x16xbf16>, vector<16x128xbf16>, vector<16x128xf32> -> vector<16x128xf32>
      %c0_14 = arith.constant 0 : index
      %c0_15 = arith.constant 0 : index
      %27 = vector.load %arg5[%c0_14, %c0_15] : memref<1x128xf32, #tpu.memory_space<vmem>>, vector<1x128xf32>
      %28 = vector.broadcast %27 : vector<1x128xf32> to vector<16x128xf32>
      %29 = arith.addf %26, %28 : vector<16x128xf32>
      %cst_16 = arith.constant 0.000000e+00 : f32
      %30 = vector.broadcast %cst_16 : f32 to vector<16x128xf32>
      %31 = arith.maximumf %29, %30 : vector<16x128xf32>
      %32 = arith.truncf %31 : vector<16x128xf32> to vector<16x128xbf16>
      %c0_17 = arith.constant 0 : index
      %c0_18 = arith.constant 0 : index
      %33 = vector.load %arg6[%c0_17, %c0_18] : memref<128x128xbf16, #tpu.memory_space<vmem>>, vector<128x128xbf16>
      %cst_19 = arith.constant dense<0.000000e+00> : vector<16x128xf32>
      %34 = tpu.matmul %32, %33, %cst_19 {dimension_numbers = #tpu.dot_dimension_numbers<[1], [0], [0], [1], [0, 0, 1, 1], [], []>} : vector<16x128xbf16>, vector<128x128xbf16>, vector<16x128xf32> -> vector<16x128xf32>
      %c0_20 = arith.constant 0 : index
      %c0_21 = arith.constant 0 : index
      %35 = vector.load %arg7[%c0_20, %c0_21] : memref<1x128xf32, #tpu.memory_space<vmem>>, vector<1x128xf32>
      %36 = vector.broadcast %35 : vector<1x128xf32> to vector<16x128xf32>
      %37 = arith.addf %34, %36 : vector<16x128xf32>
      %cst_22 = arith.constant 0.000000e+00 : f32
      %38 = vector.broadcast %cst_22 : f32 to vector<16x128xf32>
      %39 = arith.maximumf %37, %38 : vector<16x128xf32>
      %40 = arith.index_cast %1 : i32 to index
      %c0_23 = arith.constant 0 : index
      %41 = vector.load %arg20[%40, %c0_23] : memref<16x128xf32, #tpu.memory_space<vmem>>, vector<16x128xf32>
      tpu.vector_store %arg20[%40, %c0_23], %39 {strides = array<i32>} : memref<16x128xf32, #tpu.memory_space<vmem>>, vector<16x128xf32>,
      %c0_24 = arith.constant 0 : index
      %c0_25 = arith.constant 0 : index
      %42 = vector.load %arg22[%c0_24, %c0_25] : memref<1x128xf32, #tpu.memory_space<vmem>>, vector<1x128xf32>
      %cst_26 = arith.constant dense<0.000000e+00> : vector<128xf32>
      %43 = vector.multi_reduction <add>, %39, %cst_26 [0] : vector<16x128xf32> to vector<128xf32>
      %44 = vector.shape_cast %43 : vector<128xf32> to vector<1x128xf32>
      %45 = arith.addf %42, %44 : vector<1x128xf32>
      %c0_27 = arith.constant 0 : index
      %c0_28 = arith.constant 0 : index
      %46 = vector.load %arg22[%c0_27, %c0_28] : memref<1x128xf32, #tpu.memory_space<vmem>>, vector<1x128xf32>
      tpu.vector_store %arg22[%c0_27, %c0_28], %45 {strides = array<i32>} : memref<1x128xf32, #tpu.memory_space<vmem>>, vector<1x128xf32>,
      %c0_29 = arith.constant 0 : index
      %c0_30 = arith.constant 0 : index
      %47 = vector.load %arg23[%c0_29, %c0_30] : memref<1x128xf32, #tpu.memory_space<vmem>>, vector<1x128xf32>
      %48 = arith.mulf %39, %39 : vector<16x128xf32>
      %cst_31 = arith.constant dense<0.000000e+00> : vector<128xf32>
      %49 = vector.multi_reduction <add>, %48, %cst_31 [0] : vector<16x128xf32> to vector<128xf32>
      %50 = vector.shape_cast %49 : vector<128xf32> to vector<1x128xf32>
      %51 = arith.addf %47, %50 : vector<1x128xf32>
      %c0_32 = arith.constant 0 : index
      %c0_33 = arith.constant 0 : index
      %52 = vector.load %arg23[%c0_32, %c0_33] : memref<1x128xf32, #tpu.memory_space<vmem>>, vector<1x128xf32>
      tpu.vector_store %arg23[%c0_32, %c0_33], %51 {strides = array<i32>} : memref<1x128xf32, #tpu.memory_space<vmem>>, vector<1x128xf32>,
    } else {
    }
    %c0_i32_5 = arith.constant 0 : i32
    %11 = arith.cmpi eq, %arg0, %c0_i32_5 : i32
    %c0_i32_6 = arith.constant 0 : i32
    %12 = arith.cmpi eq, %arg1, %c0_i32_6 : i32
    %13 = arith.andi %11, %12 : i1
    %14 = arith.extui %13 : i1 to i32
    %c0_i32_7 = arith.constant 0 : i32
    %15 = arith.cmpi ne, %14, %c0_i32_7 : i32
    scf.if %15 {
      %c0_12 = arith.constant 0 : index
      %c0_13 = arith.constant 0 : index
      %24 = vector.load %arg22[%c0_12, %c0_13] : memref<1x128xf32, #tpu.memory_space<vmem>>, vector<1x128xf32>
      %cst = arith.constant 6.250000e-02 : f32
      %25 = vector.broadcast %cst : f32 to vector<1x128xf32>
      %26 = arith.mulf %24, %25 : vector<1x128xf32>
      %c0_14 = arith.constant 0 : index
      %c0_15 = arith.constant 0 : index
      %27 = vector.load %arg23[%c0_14, %c0_15] : memref<1x128xf32, #tpu.memory_space<vmem>>, vector<1x128xf32>
      %cst_16 = arith.constant 6.250000e-02 : f32
      %28 = vector.broadcast %cst_16 : f32 to vector<1x128xf32>
      %29 = arith.mulf %27, %28 : vector<1x128xf32>
      %30 = arith.mulf %26, %26 : vector<1x128xf32>
      %31 = arith.subf %29, %30 : vector<1x128xf32>
      %cst_17 = arith.constant 0.000000e+00 : f32
      %32 = vector.broadcast %cst_17 : f32 to vector<1x128xf32>
      %33 = arith.maximumf %31, %32 : vector<1x128xf32>
      %c0_18 = arith.constant 0 : index
      %c0_19 = arith.constant 0 : index
      %34 = vector.load %arg8[%c0_18, %c0_19] : memref<1x128xf32, #tpu.memory_space<vmem>>, vector<1x128xf32>
      %cst_20 = arith.constant 9.99999974E-6 : f32
      %35 = vector.broadcast %cst_20 : f32 to vector<1x128xf32>
      %36 = arith.addf %33, %35 : vector<1x128xf32>
      %37 = math.rsqrt %36 : vector<1x128xf32>
      %38 = arith.mulf %34, %37 : vector<1x128xf32>
      %c0_21 = arith.constant 0 : index
      %c0_22 = arith.constant 0 : index
      %39 = vector.load %arg9[%c0_21, %c0_22] : memref<1x128xf32, #tpu.memory_space<vmem>>, vector<1x128xf32>
      %40 = arith.mulf %26, %38 : vector<1x128xf32>
      %41 = arith.subf %39, %40 : vector<1x128xf32>
      %c0_23 = arith.constant 0 : index
      %c0_24 = arith.constant 0 : index
      %42 = vector.load %arg20[%c0_23, %c0_24] : memref<16x128xf32, #tpu.memory_space<vmem>>, vector<16x128xf32>
      %43 = vector.broadcast %38 : vector<1x128xf32> to vector<16x128xf32>
      %44 = arith.mulf %42, %43 : vector<16x128xf32>
      %45 = vector.broadcast %41 : vector<1x128xf32> to vector<16x128xf32>
      %46 = arith.addf %44, %45 : vector<16x128xf32>
      %c0_25 = arith.constant 0 : index
      %c0_26 = arith.constant 0 : index
      %47 = vector.load %arg20[%c0_25, %c0_26] : memref<16x128xf32, #tpu.memory_space<vmem>>, vector<16x128xf32>
      tpu.vector_store %arg20[%c0_25, %c0_26], %46 {strides = array<i32>} : memref<16x128xf32, #tpu.memory_space<vmem>>, vector<16x128xf32>,
    } else {
    }
    %c1_i32 = arith.constant 1 : i32
    %16 = arith.cmpi eq, %arg0, %c1_i32 : i32
    %17 = arith.extui %16 : i1 to i32
    %c0_i32_8 = arith.constant 0 : i32
    %18 = arith.cmpi ne, %17, %c0_i32_8 : i32
    scf.if %18 {
      %c0_12 = arith.constant 0 : index
      %c0_13 = arith.constant 0 : index
      %24 = vector.load %arg20[%c0_12, %c0_13] : memref<16x128xf32, #tpu.memory_space<vmem>>, vector<16x128xf32>
      %25 = arith.truncf %24 : vector<16x128xf32> to vector<16x128xbf16>
      %cst = arith.constant dense<0.000000e+00> : vector<16x128xf32>
      %26 = tpu.matmul %7, %25, %cst {dimension_numbers = #tpu.dot_dimension_numbers<[1], [0], [0], [1], [0, 0, 1, 1], [], []>} : vector<16x16xbf16>, vector<16x128xbf16>, vector<16x128xf32> -> vector<16x128xf32>
      %27 = arith.truncf %26 : vector<16x128xf32> to vector<16x128xbf16>
      %c0_14 = arith.constant 0 : index
      %c0_15 = arith.constant 0 : index
      %28 = vector.load %arg10[%c0_14, %c0_15] : memref<128x128xbf16, #tpu.memory_space<vmem>>, vector<128x128xbf16>
      %cst_16 = arith.constant dense<0.000000e+00> : vector<16x128xf32>
      %29 = tpu.matmul %27, %28, %cst_16 {dimension_numbers = #tpu.dot_dimension_numbers<[1], [0], [0], [1], [0, 0, 1, 1], [], []>} : vector<16x128xbf16>, vector<128x128xbf16>, vector<16x128xf32> -> vector<16x128xf32>
      %c0_17 = arith.constant 0 : index
      %c0_18 = arith.constant 0 : index
      %30 = vector.load %arg11[%c0_17, %c0_18] : memref<1x128xf32, #tpu.memory_space<vmem>>, vector<1x128xf32>
      %31 = vector.broadcast %30 : vector<1x128xf32> to vector<16x128xf32>
      %32 = arith.addf %29, %31 : vector<16x128xf32>
      %cst_19 = arith.constant 0.000000e+00 : f32
      %33 = vector.broadcast %cst_19 : f32 to vector<16x128xf32>
      %34 = arith.maximumf %32, %33 : vector<16x128xf32>
      %35 = arith.truncf %34 : vector<16x128xf32> to vector<16x128xbf16>
      %c0_20 = arith.constant 0 : index
      %c0_21 = arith.constant 0 : index
      %36 = vector.load %arg12[%c0_20, %c0_21] : memref<128x128xbf16, #tpu.memory_space<vmem>>, vector<128x128xbf16>
      %cst_22 = arith.constant dense<0.000000e+00> : vector<16x128xf32>
      %37 = tpu.matmul %35, %36, %cst_22 {dimension_numbers = #tpu.dot_dimension_numbers<[1], [0], [0], [1], [0, 0, 1, 1], [], []>} : vector<16x128xbf16>, vector<128x128xbf16>, vector<16x128xf32> -> vector<16x128xf32>
      %c0_23 = arith.constant 0 : index
      %c0_24 = arith.constant 0 : index
      %38 = vector.load %arg13[%c0_23, %c0_24] : memref<1x128xf32, #tpu.memory_space<vmem>>, vector<1x128xf32>
      %39 = vector.broadcast %38 : vector<1x128xf32> to vector<16x128xf32>
      %40 = arith.addf %37, %39 : vector<16x128xf32>
      %cst_25 = arith.constant 0.000000e+00 : f32
      %41 = vector.broadcast %cst_25 : f32 to vector<16x128xf32>
      %42 = arith.maximumf %40, %41 : vector<16x128xf32>
      %43 = arith.index_cast %1 : i32 to index
      %c0_26 = arith.constant 0 : index
      %44 = vector.load %arg21[%43, %c0_26] : memref<16x128xf32, #tpu.memory_space<vmem>>, vector<16x128xf32>
      tpu.vector_store %arg21[%43, %c0_26], %42 {strides = array<i32>} : memref<16x128xf32, #tpu.memory_space<vmem>>, vector<16x128xf32>,
      %c0_27 = arith.constant 0 : index
      %c0_28 = arith.constant 0 : index
      %45 = vector.load %arg24[%c0_27, %c0_28] : memref<1x128xf32, #tpu.memory_space<vmem>>, vector<1x128xf32>
      %cst_29 = arith.constant dense<0.000000e+00> : vector<128xf32>
      %46 = vector.multi_reduction <add>, %42, %cst_29 [0] : vector<16x128xf32> to vector<128xf32>
      %47 = vector.shape_cast %46 : vector<128xf32> to vector<1x128xf32>
      %48 = arith.addf %45, %47 : vector<1x128xf32>
      %c0_30 = arith.constant 0 : index
      %c0_31 = arith.constant 0 : index
      %49 = vector.load %arg24[%c0_30, %c0_31] : memref<1x128xf32, #tpu.memory_space<vmem>>, vector<1x128xf32>
      tpu.vector_store %arg24[%c0_30, %c0_31], %48 {strides = array<i32>} : memref<1x128xf32, #tpu.memory_space<vmem>>, vector<1x128xf32>,
      %c0_32 = arith.constant 0 : index
      %c0_33 = arith.constant 0 : index
      %50 = vector.load %arg25[%c0_32, %c0_33] : memref<1x128xf32, #tpu.memory_space<vmem>>, vector<1x128xf32>
      %51 = arith.mulf %42, %42 : vector<16x128xf32>
      %cst_34 = arith.constant dense<0.000000e+00> : vector<128xf32>
      %52 = vector.multi_reduction <add>, %51, %cst_34 [0] : vector<16x128xf32> to vector<128xf32>
      %53 = vector.shape_cast %52 : vector<128xf32> to vector<1x128xf32>
      %54 = arith.addf %50, %53 : vector<1x128xf32>
      %c0_35 = arith.constant 0 : index
      %c0_36 = arith.constant 0 : index
      %55 = vector.load %arg25[%c0_35, %c0_36] : memref<1x128xf32, #tpu.memory_space<vmem>>, vector<1x128xf32>
      tpu.vector_store %arg25[%c0_35, %c0_36], %54 {strides = array<i32>} : memref<1x128xf32, #tpu.memory_space<vmem>>, vector<1x128xf32>,
    } else {
    }
    %c1_i32_9 = arith.constant 1 : i32
    %19 = arith.cmpi eq, %arg0, %c1_i32_9 : i32
    %c0_i32_10 = arith.constant 0 : i32
    %20 = arith.cmpi eq, %arg1, %c0_i32_10 : i32
    %21 = arith.andi %19, %20 : i1
    %22 = arith.extui %21 : i1 to i32
    %c0_i32_11 = arith.constant 0 : i32
    %23 = arith.cmpi ne, %22, %c0_i32_11 : i32
    scf.if %23 {
      %c0_12 = arith.constant 0 : index
      %c0_13 = arith.constant 0 : index
      %24 = vector.load %arg24[%c0_12, %c0_13] : memref<1x128xf32, #tpu.memory_space<vmem>>, vector<1x128xf32>
      %cst = arith.constant 6.250000e-02 : f32
      %25 = vector.broadcast %cst : f32 to vector<1x128xf32>
      %26 = arith.mulf %24, %25 : vector<1x128xf32>
      %c0_14 = arith.constant 0 : index
      %c0_15 = arith.constant 0 : index
      %27 = vector.load %arg25[%c0_14, %c0_15] : memref<1x128xf32, #tpu.memory_space<vmem>>, vector<1x128xf32>
      %cst_16 = arith.constant 6.250000e-02 : f32
      %28 = vector.broadcast %cst_16 : f32 to vector<1x128xf32>
      %29 = arith.mulf %27, %28 : vector<1x128xf32>
      %30 = arith.mulf %26, %26 : vector<1x128xf32>
      %31 = arith.subf %29, %30 : vector<1x128xf32>
      %cst_17 = arith.constant 0.000000e+00 : f32
      %32 = vector.broadcast %cst_17 : f32 to vector<1x128xf32>
      %33 = arith.maximumf %31, %32 : vector<1x128xf32>
      %c0_18 = arith.constant 0 : index
      %c0_19 = arith.constant 0 : index
      %34 = vector.load %arg14[%c0_18, %c0_19] : memref<1x128xf32, #tpu.memory_space<vmem>>, vector<1x128xf32>
      %cst_20 = arith.constant 9.99999974E-6 : f32
      %35 = vector.broadcast %cst_20 : f32 to vector<1x128xf32>
      %36 = arith.addf %33, %35 : vector<1x128xf32>
      %37 = math.rsqrt %36 : vector<1x128xf32>
      %38 = arith.mulf %34, %37 : vector<1x128xf32>
      %c0_21 = arith.constant 0 : index
      %c0_22 = arith.constant 0 : index
      %39 = vector.load %arg15[%c0_21, %c0_22] : memref<1x128xf32, #tpu.memory_space<vmem>>, vector<1x128xf32>
      %40 = arith.mulf %26, %38 : vector<1x128xf32>
      %41 = arith.subf %39, %40 : vector<1x128xf32>
      %c0_23 = arith.constant 0 : index
      %c0_24 = arith.constant 0 : index
      %42 = vector.load %arg21[%c0_23, %c0_24] : memref<16x128xf32, #tpu.memory_space<vmem>>, vector<16x128xf32>
      %43 = vector.broadcast %38 : vector<1x128xf32> to vector<16x128xf32>
      %44 = arith.mulf %42, %43 : vector<16x128xf32>
      %45 = vector.broadcast %41 : vector<1x128xf32> to vector<16x128xf32>
      %46 = arith.addf %44, %45 : vector<16x128xf32>
      %c0_25 = arith.constant 0 : index
      %c0_26 = arith.constant 0 : index
      %47 = vector.load %arg16[%c0_25, %c0_26] : memref<2x16xbf16, #tpu.memory_space<vmem>>, vector<2x16xbf16>
      %48 = arith.truncf %46 : vector<16x128xf32> to vector<16x128xbf16>
      %cst_27 = arith.constant dense<0.000000e+00> : vector<2x128xf32>
      %49 = tpu.matmul %47, %48, %cst_27 {dimension_numbers = #tpu.dot_dimension_numbers<[1], [0], [0], [1], [0, 0, 1, 1], [], []>} : vector<2x16xbf16>, vector<16x128xbf16>, vector<2x128xf32> -> vector<2x128xf32>
      %c0_28 = arith.constant 0 : index
      %c0_29 = arith.constant 0 : index
      %50 = vector.load %arg17[%c0_28, %c0_29] : memref<2x1xf32, #tpu.memory_space<vmem>>, vector<2x1xf32>
      %51 = vector.broadcast %50 : vector<2x1xf32> to vector<2x128xf32>
      %52 = arith.mulf %49, %51 : vector<2x128xf32>
      %c0_30 = arith.constant 0 : index
      %c0_31 = arith.constant 0 : index
      %53 = vector.load %arg18[%c0_30, %c0_31] : memref<2x128xf32, #tpu.memory_space<vmem>>, vector<2x128xf32>
      tpu.vector_store %arg18[%c0_30, %c0_31], %52 {strides = array<i32>} : memref<2x128xf32, #tpu.memory_space<vmem>>, vector<2x128xf32>,
    } else {
    }
    return
  }
  func.func @transform_0(%arg0: i32, %arg1: i32) -> (i32, i32) {
    %c0_i32 = arith.constant 0 : i32
    %c0_i32_0 = arith.constant 0 : i32
    %c0_i32_1 = arith.constant 0 : i32
    return %c0_i32, %c0_i32_0 : i32, i32
  }
  func.func @transform_1(%arg0: i32, %arg1: i32) -> (i32, i32) {
    %c0_i32 = arith.constant 0 : i32
    %c0_i32_0 = arith.constant 0 : i32
    return %arg1, %c0_i32 : i32, i32
  }
  func.func @transform_2(%arg0: i32, %arg1: i32) -> (i32, i32) {
    %c0_i32 = arith.constant 0 : i32
    %c0_i32_0 = arith.constant 0 : i32
    %c0_i32_1 = arith.constant 0 : i32
    return %c0_i32, %c0_i32_0 : i32, i32
  }
  func.func @transform_3(%arg0: i32, %arg1: i32) -> (i32, i32) {
    %c0_i32 = arith.constant 0 : i32
    %c0_i32_0 = arith.constant 0 : i32
    %c0_i32_1 = arith.constant 0 : i32
    return %c0_i32, %c0_i32_0 : i32, i32
  }
  func.func @transform_4(%arg0: i32, %arg1: i32) -> (i32, i32) {
    %c0_i32 = arith.constant 0 : i32
    %c0_i32_0 = arith.constant 0 : i32
    %c0_i32_1 = arith.constant 0 : i32
    return %c0_i32, %c0_i32_0 : i32, i32
  }
  func.func @transform_5(%arg0: i32, %arg1: i32) -> (i32, i32) {
    %c0_i32 = arith.constant 0 : i32
    %c0_i32_0 = arith.constant 0 : i32
    %c0_i32_1 = arith.constant 0 : i32
    return %c0_i32, %c0_i32_0 : i32, i32
  }
  func.func @transform_6(%arg0: i32, %arg1: i32) -> (i32, i32) {
    %c0_i32 = arith.constant 0 : i32
    %c0_i32_0 = arith.constant 0 : i32
    %c0_i32_1 = arith.constant 0 : i32
    return %c0_i32, %c0_i32_0 : i32, i32
  }
  func.func @transform_7(%arg0: i32, %arg1: i32) -> (i32, i32) {
    %c0_i32 = arith.constant 0 : i32
    %c0_i32_0 = arith.constant 0 : i32
    %c0_i32_1 = arith.constant 0 : i32
    return %c0_i32, %c0_i32_0 : i32, i32
  }
  func.func @transform_8(%arg0: i32, %arg1: i32) -> (i32, i32) {
    %c0_i32 = arith.constant 0 : i32
    %c0_i32_0 = arith.constant 0 : i32
    %c0_i32_1 = arith.constant 0 : i32
    return %c0_i32, %c0_i32_0 : i32, i32
  }
  func.func @transform_9(%arg0: i32, %arg1: i32) -> (i32, i32) {
    %c0_i32 = arith.constant 0 : i32
    %c0_i32_0 = arith.constant 0 : i32
    %c0_i32_1 = arith.constant 0 : i32
    return %c0_i32, %c0_i32_0 : i32, i32
  }
  func.func @transform_10(%arg0: i32, %arg1: i32) -> (i32, i32) {
    %c0_i32 = arith.constant 0 : i32
    %c0_i32_0 = arith.constant 0 : i32
    %c0_i32_1 = arith.constant 0 : i32
    return %c0_i32, %c0_i32_0 : i32, i32
  }
  func.func @transform_11(%arg0: i32, %arg1: i32) -> (i32, i32) {
    %c0_i32 = arith.constant 0 : i32
    %c0_i32_0 = arith.constant 0 : i32
    %c0_i32_1 = arith.constant 0 : i32
    return %c0_i32, %c0_i32_0 : i32, i32
  }
  func.func @transform_12(%arg0: i32, %arg1: i32) -> (i32, i32) {
    %c0_i32 = arith.constant 0 : i32
    %c0_i32_0 = arith.constant 0 : i32
    %c0_i32_1 = arith.constant 0 : i32
    return %c0_i32, %c0_i32_0 : i32, i32
  }
  func.func @transform_13(%arg0: i32, %arg1: i32) -> (i32, i32) {
    %c0_i32 = arith.constant 0 : i32
    %c0_i32_0 = arith.constant 0 : i32
    %c0_i32_1 = arith.constant 0 : i32
    return %c0_i32, %c0_i32_0 : i32, i32
  }
  func.func @transform_14(%arg0: i32, %arg1: i32) -> (i32, i32) {
    %c0_i32 = arith.constant 0 : i32
    %c0_i32_0 = arith.constant 0 : i32
    %c0_i32_1 = arith.constant 0 : i32
    return %c0_i32, %c0_i32_0 : i32, i32
  }
  func.func @transform_15(%arg0: i32, %arg1: i32) -> (i32, i32) {
    %c0_i32 = arith.constant 0 : i32
    %c0_i32_0 = arith.constant 0 : i32
    %c0_i32_1 = arith.constant 0 : i32
    return %c0_i32, %c0_i32_0 : i32, i32
  }
  func.func @transform_16(%arg0: i32, %arg1: i32) -> (i32, i32) {
    %c0_i32 = arith.constant 0 : i32
    %c0_i32_0 = arith.constant 0 : i32
    %c0_i32_1 = arith.constant 0 : i32
    return %c0_i32, %c0_i32_0 : i32, i32
  }
}

</mosaic_0001>

<llo_original>
// kernel: tpu_custom_call.1
$region0: #{tpu_custom_call.1}
  #allocation0 [shape = 'u32[]', space=smem, size = 0x4, offset = 0x4, fixed_abs, tag = 'smem constant byte address 0x4 - core index']
  #allocation1 [shape = 'u32[144,128]{1,0:T(1,128)}', space=vmem, size = 0x12000, scoped, tag = 'internal scratch']
  #allocation2 [shape = 'f32[16,128]{1,0:T(8,128)}', space=vmem, size = 0x2000, scoped, tag = 'scratch operand']
  #allocation3 [shape = 'f32[16,128]{1,0:T(8,128)}', space=vmem, size = 0x2000, scoped, tag = 'scratch operand']
  #allocation4 [shape = 'f32[16,128]{1,0:T(8,128)}', space=vmem, size = 0x2000, scoped, tag = 'scratch operand']
  #allocation5 [shape = 'f32[1,128]{1,0:T(1,128)}', space=vmem, size = 0x200, scoped, tag = 'scratch operand']
  #allocation6 [shape = 'f32[1,128]{1,0:T(1,128)}', space=vmem, size = 0x200, scoped, tag = 'scratch operand']
  #allocation7 [shape = 'f32[1,128]{1,0:T(1,128)}', space=vmem, size = 0x200, scoped, tag = 'scratch operand']
  #allocation8 [shape = 'f32[1,128]{1,0:T(1,128)}', space=vmem, size = 0x200, scoped, tag = 'scratch operand']
  %s0 = inlined_call_operand.hbm [shape: f32[16,128], index: 0, kind: input, shape index: {}]
  %s1 = inlined_call_operand.hbm [shape: bf16[16,16], index: 1, kind: input, shape index: {}]
  %s2 = inlined_call_operand.hbm [shape: bf16[128,128], index: 2, kind: input, shape index: {}]
  %s3 = inlined_call_operand.vmem [shape: f32[1,128], index: 3, kind: input, shape index: {}]
  %s4 = inlined_call_operand.hbm [shape: bf16[128,128], index: 4, kind: input, shape index: {}]
  %s5 = inlined_call_operand.vmem [shape: f32[1,128], index: 5, kind: input, shape index: {}]
  %s6 = inlined_call_operand.vmem [shape: f32[1,128], index: 6, kind: input, shape index: {}]
  %s7 = inlined_call_operand.vmem [shape: f32[1,128], index: 7, kind: input, shape index: {}]
  %s8 = inlined_call_operand.hbm [shape: bf16[128,128], index: 8, kind: input, shape index: {}]
  %s9 = inlined_call_operand.vmem [shape: f32[1,128], index: 9, kind: input, shape index: {}]
  %s10 = inlined_call_operand.hbm [shape: bf16[128,128], index: 10, kind: input, shape index: {}]
  %s11 = inlined_call_operand.vmem [shape: f32[1,128], index: 11, kind: input, shape index: {}]
  %s12 = inlined_call_operand.vmem [shape: f32[1,128], index: 12, kind: input, shape index: {}]
  %s13 = inlined_call_operand.vmem [shape: f32[1,128], index: 13, kind: input, shape index: {}]
  %s14 = inlined_call_operand.vmem [shape: bf16[2,16], index: 14, kind: input, shape index: {}]
  %s15 = inlined_call_operand.vmem [shape: f32[2,1], index: 15, kind: input, shape index: {}]
  %s16 = inlined_call_operand.hbm [shape: f32[2,128], index: 16, kind: output, shape index: {}]
  %s17 = sld [smem:[#allocation0]]
  $region141: #{tpu_custom_call.1} parent=0
    _
  %s19 = ssub.s32 1, %s17
  %s20 = scalar_select 0, %s19, %s17
  $region1: #{tpu_custom_call.1} parent=0
    #allocation9 [shape = 'u8[8192]{0}', space=vmem, size = 0x2000, scoped, tag = 'input window, operand 0, single buffered']
    #allocation10 [shape = 's32[2]{0}', space=sflag, size = 0x8, scoped, tag = 'scoped memory for tpu_custom_call.1']
    #allocation11 [shape = 's32[2]{0}', space=sflag, size = 0x8, scoped, tag = 'scoped memory for tpu_custom_call.1']
    #allocation12 [shape = 'u8[4096]{0}', space=vmem, size = 0x1000, scoped, tag = 'input window, operand 1, single buffered']
    #allocation13 [shape = 's32[1]{0}', space=sflag, size = 0x4, scoped, tag = 'scoped memory for tpu_custom_call.1']
    #allocation14 [shape = 'u8[32768]{0}', space=vmem, size = 0x8000, scoped, tag = 'input window, operand 2, single buffered']
    #allocation15 [shape = 'u8[32768]{0}', space=vmem, size = 0x8000, scoped, tag = 'input window, operand 4, single buffered']
    #allocation16 [shape = 's32[1]{0}', space=sflag, size = 0x4, scoped, tag = 'scoped memory for tpu_custom_call.1']
    #allocation17 [shape = 'u8[32768]{0}', space=vmem, size = 0x8000, scoped, tag = 'input window, operand 8, single buffered']
    #allocation18 [shape = 'u8[32768]{0}', space=vmem, size = 0x8000, scoped, tag = 'input window, operand 10, single buffered']
    #allocation19 [shape = 's32[1]{0}', space=sflag, size = 0x4, scoped, tag = 'scoped memory for tpu_custom_call.1']
    #allocation20 [shape = 'u8[1024]{0}', space=vmem, size = 0x400, scoped, tag = 'output window, operand 0, single buffered']
    %21 = vsyncpa [#allocation10], 0
    %22 = vsyncpa [#allocation13], 0
    %23 = vsyncpa [#allocation16], 0
    %24 = vsyncpa [#allocation19], 0
    %25 = vsyncpa [#allocation11], 0
    loop: start=0, step=1, limit=4
    $region2: #{tpu_custom_call.1} parent=1 // loop_pre_header
      _
    $region3: #{tpu_custom_call.1} parent=1 // loop_header
      %s27 = sphi 0, %s31
      %p28 = scmp.ge.s32.totalorder %s27, 4
      %s34 = sphi 0, %s46
      %s35 = sphi 0, %s42
      %s36 = sphi 0, %s34
      %s37 = sphi 0, %s35
      %s38 = sphi 0, %s36
      %s39 = sphi 0, %s37
      %s47 = sphi 0, %s47
      %s49 = sphi 0, %s47
      %s50 = sphi 0, %s49
      %s64 = sphi 0, %s50
      %s70 = sphi 0, %s72
      %s73 = sphi 0, %s70
      %s74 = sphi 0, %s73
      %s90 = sphi 0, %s74
      %s94 = sphi 0, %s94
      %s96 = sphi 0, %s94
      %s97 = sphi 0, %s96
      %s111 = sphi 0, %s97
      %s115 = sphi 0, %s115
      %s117 = sphi 0, %s115
      %s118 = sphi 0, %s117
      %s132 = sphi 0, %s118
      %s136 = sphi 0, %s136
      %s138 = sphi 0, %s136
      %s139 = sphi 0, %s138
      %s153 = sphi 0, %s139
      %s157 = sphi 0, %s157
      %s159 = sphi 0, %s157
      %s160 = sphi 0, %s159
      %s174 = sphi 0, %s160
      %s178 = sphi 0, %s178
      %s180 = sphi 0, %s178
      %s181 = sphi 0, %s180
      %s195 = sphi 0, %s181
      %s199 = sphi 0, %s199
      %s201 = sphi 0, %s199
      %s202 = sphi 0, %s201
      %s216 = sphi 0, %s202
      %s220 = sphi 0, %s220
      %s222 = sphi 0, %s220
      %s223 = sphi 0, %s222
      %s237 = sphi 0, %s223
      %s241 = sphi 0, %s241
      %s243 = sphi 0, %s241
      %s244 = sphi 0, %s243
      %s258 = sphi 0, %s244
      %s262 = sphi 0, %s262
      %s264 = sphi 0, %s262
      %s265 = sphi 0, %s264
      %s279 = sphi 0, %s265
      %s283 = sphi 0, %s283
      %s285 = sphi 0, %s283
      %s286 = sphi 0, %s285
      %s300 = sphi 0, %s286
      %s304 = sphi 0, %s304
      %s306 = sphi 0, %s304
      %s307 = sphi 0, %s306
      %s321 = sphi 0, %s307
      %s325 = sphi 0, %s325
      %s327 = sphi 0, %s325
      %s328 = sphi 0, %s327
      %s342 = sphi 0, %s328
      %s346 = sphi 0, %s346
      %s348 = sphi 0, %s346
      %s349 = sphi 0, %s348
      %s363 = sphi 0, %s349
      %s367 = sphi 0, %s367
      %s369 = sphi 0, %s367
      %s370 = sphi 0, %s369
      %s384 = sphi 0, %s370
      %s388 = sphi 0, %s388
      %s390 = sphi 0, %s388
      %s391 = sphi 0, %s390
      %s405 = sphi 0, %s391
    $region4: #{tpu_custom_call.1} parent=1 // loop_header_branch
      %30 = sbr.rel (%p28) target = $region8
    $region5: #{tpu_custom_call.1} parent=1 // loop_body
      %s32 = ssub.s32 %s27, 1
      %s33 = ssub.s32 %s27, 2
      %s40 = sadd.s32 1, %s35
      %p41 = scmp.ge.s32.totalorder %s40, 1
      %s42 = scalar_select %p41, 0, %s40
      %s43 = sadd.s32 1, %s34
      %s44 = scalar_select %p41, %s43, %s34
      %p45 = scmp.ge.s32.totalorder %s44, 2
      %s46 = scalar_select %p45, 0, %s44
      %s48 = sadd.s32 %s47, 1
      %p51 = scmp.eq.s32.totalorder %s27, 1
      %p52 = scmp.ne.s32.totalorder %s47, %s49
      %p53 = scmp.eq.s32.totalorder %s27, 0
      %p54 = por %p52, %p53
      %p55 = scmp.ne.s32.totalorder %s47, %s49
      %p56 = scmp.eq.s32.totalorder %s32, 1
      %p57 = por %p55, %p56
      %p58 = scmp.ne.s32.totalorder %s49, %s50
      %p59 = scmp.eq.s32.totalorder %s32, 0
      %p60 = por %p58, %p59
      %p61 = scmp.ne.s32.totalorder %s49, %s50
      %p62 = scmp.eq.s32.totalorder %s33, 1
      %p63 = por %p61, %p62
      %p65 = scmp.ne.s32.totalorder %s50, %s64
      %p66 = scmp.eq.s32.totalorder %s33, 0
      %p67 = por %p65, %p66
      %s68 = ssub.s32 %s35, %s42
      %p69 = scmp.eq.s32.totalorder %s68, 0
      %s71 = sadd.s32 %s70, 1
      %s72 = scalar_select %p69, %s70, %s71
      %p75 = pneg %p69
      %p76 = scmp.eq.s32.totalorder %s27, 1
      %p77 = por %p75, %p76
      %p78 = scmp.ne.s32.totalorder %s70, %s73
      %p79 = scmp.eq.s32.totalorder %s27, 0
      %p80 = por %p78, %p79
      %p81 = scmp.ne.s32.totalorder %s70, %s73
      %p82 = scmp.eq.s32.totalorder %s32, 1
      %p83 = por %p81, %p82
      %p84 = scmp.ne.s32.totalorder %s73, %s74
      %p85 = scmp.eq.s32.totalorder %s32, 0
      %p86 = por %p84, %p85
      %p87 = scmp.ne.s32.totalorder %s73, %s74
      %p88 = scmp.eq.s32.totalorder %s33, 1
      %p89 = por %p87, %p88
      %p91 = scmp.ne.s32.totalorder %s74, %s90
      %p92 = scmp.eq.s32.totalorder %s33, 0
      %p93 = por %p91, %p92
      %s95 = sadd.s32 %s94, 1
      %p98 = scmp.eq.s32.totalorder %s27, 1
      %p99 = scmp.ne.s32.totalorder %s94, %s96
      %p100 = scmp.eq.s32.totalorder %s27, 0
      %p101 = por %p99, %p100
      %p102 = scmp.ne.s32.totalorder %s94, %s96
      %p103 = scmp.eq.s32.totalorder %s32, 1
      %p104 = por %p102, %p103
      %p105 = scmp.ne.s32.totalorder %s96, %s97
      %p106 = scmp.eq.s32.totalorder %s32, 0
      %p107 = por %p105, %p106
      %p108 = scmp.ne.s32.totalorder %s96, %s97
      %p109 = scmp.eq.s32.totalorder %s33, 1
      %p110 = por %p108, %p109
      %p112 = scmp.ne.s32.totalorder %s97, %s111
      %p113 = scmp.eq.s32.totalorder %s33, 0
      %p114 = por %p112, %p113
      %s116 = sadd.s32 %s115, 1
      %p119 = scmp.eq.s32.totalorder %s27, 1
      %p120 = scmp.ne.s32.totalorder %s115, %s117
      %p121 = scmp.eq.s32.totalorder %s27, 0
      %p122 = por %p120, %p121
      %p123 = scmp.ne.s32.totalorder %s115, %s117
      %p124 = scmp.eq.s32.totalorder %s32, 1
      %p125 = por %p123, %p124
      %p126 = scmp.ne.s32.totalorder %s117, %s118
      %p127 = scmp.eq.s32.totalorder %s32, 0
      %p128 = por %p126, %p127
      %p129 = scmp.ne.s32.totalorder %s117, %s118
      %p130 = scmp.eq.s32.totalorder %s33, 1
      %p131 = por %p129, %p130
      %p133 = scmp.ne.s32.totalorder %s118, %s132
      %p134 = scmp.eq.s32.totalorder %s33, 0
      %p135 = por %p133, %p134
      %s137 = sadd.s32 %s136, 1
      %p140 = scmp.eq.s32.totalorder %s27, 1
      %p141 = scmp.ne.s32.totalorder %s136, %s138
      %p142 = scmp.eq.s32.totalorder %s27, 0
      %p143 = por %p141, %p142
      %p144 = scmp.ne.s32.totalorder %s136, %s138
      %p145 = scmp.eq.s32.totalorder %s32, 1
      %p146 = por %p144, %p145
      %p147 = scmp.ne.s32.totalorder %s138, %s139
      %p148 = scmp.eq.s32.totalorder %s32, 0
      %p149 = por %p147, %p148
      %p150 = scmp.ne.s32.totalorder %s138, %s139
      %p151 = scmp.eq.s32.totalorder %s33, 1
      %p152 = por %p150, %p151
      %p154 = scmp.ne.s32.totalorder %s139, %s153
      %p155 = scmp.eq.s32.totalorder %s33, 0
      %p156 = por %p154, %p155
      %s158 = sadd.s32 %s157, 1
      %p161 = scmp.eq.s32.totalorder %s27, 1
      %p162 = scmp.ne.s32.totalorder %s157, %s159
      %p163 = scmp.eq.s32.totalorder %s27, 0
      %p164 = por %p162, %p163
      %p165 = scmp.ne.s32.totalorder %s157, %s159
      %p166 = scmp.eq.s32.totalorder %s32, 1
      %p167 = por %p165, %p166
      %p168 = scmp.ne.s32.totalorder %s159, %s160
      %p169 = scmp.eq.s32.totalorder %s32, 0
      %p170 = por %p168, %p169
      %p171 = scmp.ne.s32.totalorder %s159, %s160
      %p172 = scmp.eq.s32.totalorder %s33, 1
      %p173 = por %p171, %p172
      %p175 = scmp.ne.s32.totalorder %s160, %s174
      %p176 = scmp.eq.s32.totalorder %s33, 0
      %p177 = por %p175, %p176
      %s179 = sadd.s32 %s178, 1
      %p182 = scmp.eq.s32.totalorder %s27, 1
      %p183 = scmp.ne.s32.totalorder %s178, %s180
      %p184 = scmp.eq.s32.totalorder %s27, 0
      %p185 = por %p183, %p184
      %p186 = scmp.ne.s32.totalorder %s178, %s180
      %p187 = scmp.eq.s32.totalorder %s32, 1
      %p188 = por %p186, %p187
      %p189 = scmp.ne.s32.totalorder %s180, %s181
      %p190 = scmp.eq.s32.totalorder %s32, 0
      %p191 = por %p189, %p190
      %p192 = scmp.ne.s32.totalorder %s180, %s181
      %p193 = scmp.eq.s32.totalorder %s33, 1
      %p194 = por %p192, %p193
      %p196 = scmp.ne.s32.totalorder %s181, %s195
      %p197 = scmp.eq.s32.totalorder %s33, 0
      %p198 = por %p196, %p197
      %s200 = sadd.s32 %s199, 1
      %p203 = scmp.eq.s32.totalorder %s27, 1
      %p204 = scmp.ne.s32.totalorder %s199, %s201
      %p205 = scmp.eq.s32.totalorder %s27, 0
      %p206 = por %p204, %p205
      %p207 = scmp.ne.s32.totalorder %s199, %s201
      %p208 = scmp.eq.s32.totalorder %s32, 1
      %p209 = por %p207, %p208
      %p210 = scmp.ne.s32.totalorder %s201, %s202
      %p211 = scmp.eq.s32.totalorder %s32, 0
      %p212 = por %p210, %p211
      %p213 = scmp.ne.s32.totalorder %s201, %s202
      %p214 = scmp.eq.s32.totalorder %s33, 1
      %p215 = por %p213, %p214
      %p217 = scmp.ne.s32.totalorder %s202, %s216
      %p218 = scmp.eq.s32.totalorder %s33, 0
      %p219 = por %p217, %p218
      %s221 = sadd.s32 %s220, 1
      %p224 = scmp.eq.s32.totalorder %s27, 1
      %p225 = scmp.ne.s32.totalorder %s220, %s222
      %p226 = scmp.eq.s32.totalorder %s27, 0
      %p227 = por %p225, %p226
      %p228 = scmp.ne.s32.totalorder %s220, %s222
      %p229 = scmp.eq.s32.totalorder %s32, 1
      %p230 = por %p228, %p229
      %p231 = scmp.ne.s32.totalorder %s222, %s223
      %p232 = scmp.eq.s32.totalorder %s32, 0
      %p233 = por %p231, %p232
      %p234 = scmp.ne.s32.totalorder %s222, %s223
      %p235 = scmp.eq.s32.totalorder %s33, 1
      %p236 = por %p234, %p235
      %p238 = scmp.ne.s32.totalorder %s223, %s237
      %p239 = scmp.eq.s32.totalorder %s33, 0
      %p240 = por %p238, %p239
      %s242 = sadd.s32 %s241, 1
      %p245 = scmp.eq.s32.totalorder %s27, 1
      %p246 = scmp.ne.s32.totalorder %s241, %s243
      %p247 = scmp.eq.s32.totalorder %s27, 0
      %p248 = por %p246, %p247
      %p249 = scmp.ne.s32.totalorder %s241, %s243
      %p250 = scmp.eq.s32.totalorder %s32, 1
      %p251 = por %p249, %p250
      %p252 = scmp.ne.s32.totalorder %s243, %s244
      %p253 = scmp.eq.s32.totalorder %s32, 0
      %p254 = por %p252, %p253
      %p255 = scmp.ne.s32.totalorder %s243, %s244
      %p256 = scmp.eq.s32.totalorder %s33, 1
      %p257 = por %p255, %p256
      %p259 = scmp.ne.s32.totalorder %s244, %s258
      %p260 = scmp.eq.s32.totalorder %s33, 0
      %p261 = por %p259, %p260
      %s263 = sadd.s32 %s262, 1
      %p266 = scmp.eq.s32.totalorder %s27, 1
      %p267 = scmp.ne.s32.totalorder %s262, %s264
      %p268 = scmp.eq.s32.totalorder %s27, 0
      %p269 = por %p267, %p268
      %p270 = scmp.ne.s32.totalorder %s262, %s264
      %p271 = scmp.eq.s32.totalorder %s32, 1
      %p272 = por %p270, %p271
      %p273 = scmp.ne.s32.totalorder %s264, %s265
      %p274 = scmp.eq.s32.totalorder %s32, 0
      %p275 = por %p273, %p274
      %p276 = scmp.ne.s32.totalorder %s264, %s265
      %p277 = scmp.eq.s32.totalorder %s33, 1
      %p278 = por %p276, %p277
      %p280 = scmp.ne.s32.totalorder %s265, %s279
      %p281 = scmp.eq.s32.totalorder %s33, 0
      %p282 = por %p280, %p281
      %s284 = sadd.s32 %s283, 1
      %p287 = scmp.eq.s32.totalorder %s27, 1
      %p288 = scmp.ne.s32.totalorder %s283, %s285
      %p289 = scmp.eq.s32.totalorder %s27, 0
      %p290 = por %p288, %p289
      %p291 = scmp.ne.s32.totalorder %s283, %s285
      %p292 = scmp.eq.s32.totalorder %s32, 1
      %p293 = por %p291, %p292
      %p294 = scmp.ne.s32.totalorder %s285, %s286
      %p295 = scmp.eq.s32.totalorder %s32, 0
      %p296 = por %p294, %p295
      %p297 = scmp.ne.s32.totalorder %s285, %s286
      %p298 = scmp.eq.s32.totalorder %s33, 1
      %p299 = por %p297, %p298
      %p301 = scmp.ne.s32.totalorder %s286, %s300
      %p302 = scmp.eq.s32.totalorder %s33, 0
      %p303 = por %p301, %p302
      %s305 = sadd.s32 %s304, 1
      %p308 = scmp.eq.s32.totalorder %s27, 1
      %p309 = scmp.ne.s32.totalorder %s304, %s306
      %p310 = scmp.eq.s32.totalorder %s27, 0
      %p311 = por %p309, %p310
      %p312 = scmp.ne.s32.totalorder %s304, %s306
      %p313 = scmp.eq.s32.totalorder %s32, 1
      %p314 = por %p312, %p313
      %p315 = scmp.ne.s32.totalorder %s306, %s307
      %p316 = scmp.eq.s32.totalorder %s32, 0
      %p317 = por %p315, %p316
      %p318 = scmp.ne.s32.totalorder %s306, %s307
      %p319 = scmp.eq.s32.totalorder %s33, 1
      %p320 = por %p318, %p319
      %p322 = scmp.ne.s32.totalorder %s307, %s321
      %p323 = scmp.eq.s32.totalorder %s33, 0
      %p324 = por %p322, %p323
      %s326 = sadd.s32 %s325, 1
      %p329 = scmp.eq.s32.totalorder %s27, 1
      %p330 = scmp.ne.s32.totalorder %s325, %s327
      %p331 = scmp.eq.s32.totalorder %s27, 0
      %p332 = por %p330, %p331
      %p333 = scmp.ne.s32.totalorder %s325, %s327
      %p334 = scmp.eq.s32.totalorder %s32, 1
      %p335 = por %p333, %p334
      %p336 = scmp.ne.s32.totalorder %s327, %s328
      %p337 = scmp.eq.s32.totalorder %s32, 0
      %p338 = por %p336, %p337
      %p339 = scmp.ne.s32.totalorder %s327, %s328
      %p340 = scmp.eq.s32.totalorder %s33, 1
      %p341 = por %p339, %p340
      %p343 = scmp.ne.s32.totalorder %s328, %s342
      %p344 = scmp.eq.s32.totalorder %s33, 0
      %p345 = por %p343, %p344
      %s347 = sadd.s32 %s346, 1
      %p350 = scmp.eq.s32.totalorder %s27, 1
      %p351 = scmp.ne.s32.totalorder %s346, %s348
      %p352 = scmp.eq.s32.totalorder %s27, 0
      %p353 = por %p351, %p352
      %p354 = scmp.ne.s32.totalorder %s346, %s348
      %p355 = scmp.eq.s32.totalorder %s32, 1
      %p356 = por %p354, %p355
      %p357 = scmp.ne.s32.totalorder %s348, %s349
      %p358 = scmp.eq.s32.totalorder %s32, 0
      %p359 = por %p357, %p358
      %p360 = scmp.ne.s32.totalorder %s348, %s349
      %p361 = scmp.eq.s32.totalorder %s33, 1
      %p362 = por %p360, %p361
      %p364 = scmp.ne.s32.totalorder %s349, %s363
      %p365 = scmp.eq.s32.totalorder %s33, 0
      %p366 = por %p364, %p365
      %s368 = sadd.s32 %s367, 1
      %p371 = scmp.eq.s32.totalorder %s27, 1
      %p372 = scmp.ne.s32.totalorder %s367, %s369
      %p373 = scmp.eq.s32.totalorder %s27, 0
      %p374 = por %p372, %p373
      %p375 = scmp.ne.s32.totalorder %s367, %s369
      %p376 = scmp.eq.s32.totalorder %s32, 1
      %p377 = por %p375, %p376
      %p378 = scmp.ne.s32.totalorder %s369, %s370
      %p379 = scmp.eq.s32.totalorder %s32, 0
      %p380 = por %p378, %p379
      %p381 = scmp.ne.s32.totalorder %s369, %s370
      %p382 = scmp.eq.s32.totalorder %s33, 1
      %p383 = por %p381, %p382
      %p385 = scmp.ne.s32.totalorder %s370, %s384
      %p386 = scmp.eq.s32.totalorder %s33, 0
      %p387 = por %p385, %p386
      %s389 = sadd.s32 %s388, 1
      %p392 = scmp.eq.s32.totalorder %s27, 1
      %p393 = scmp.ne.s32.totalorder %s388, %s390
      %p394 = scmp.eq.s32.totalorder %s27, 0
      %p395 = por %p393, %p394
      %p396 = scmp.ne.s32.totalorder %s388, %s390
      %p397 = scmp.eq.s32.totalorder %s32, 1
      %p398 = por %p396, %p397
      %p399 = scmp.ne.s32.totalorder %s390, %s391
      %p400 = scmp.eq.s32.totalorder %s32, 0
      %p401 = por %p399, %p400
      %p402 = scmp.ne.s32.totalorder %s390, %s391
      %p403 = scmp.eq.s32.totalorder %s33, 1
      %p404 = por %p402, %p403
      %p406 = scmp.ne.s32.totalorder %s391, %s405
      %p407 = scmp.eq.s32.totalorder %s33, 0
      %p408 = por %p406, %p407
      %p409 = scmp.le.s32.totalorder 1, %s27
      %p410 = scmp.lt.s32.totalorder %s27, 3
      %p411 = pnand %p409, %p410
      %p412 = pneg %p411
      // Predicated region
      $region9: #{tpu_custom_call.1} parent=5 // pred_check
        _
      $region10: #{tpu_custom_call.1} parent=5 // pred_check_branch
        %414 = sbr.rel (%p411) target = $region12
      $region11: #{tpu_custom_call.1} parent=5 // pred_region
        %s415 = ssub.s32 %s27, 1
        // Predicated region
        $region13: #{tpu_custom_call.1} parent=11 // pred_check
          %p416 = pneg %p60
        $region14: #{tpu_custom_call.1} parent=11 // pred_check_branch
          %418 = sbr.rel (%p416) target = $region16
        $region15: #{tpu_custom_call.1} parent=11 // pred_region
          %s420 = ssub.s32 256, 256
          %421 = vsyncadd [#allocation10], %s420
          %s422 = sshll.u32 [#allocation9], 4
          %s423 = int_to_ptr.vmem [resolvable:$true] %s422
          %428 = dma.hbm_to_vmem [thread:$0]  %s0, 256, %s423, [#allocation10], 128, 128, 8
        $region16: #{tpu_custom_call.1} parent=11 // pred_fallthru
          _
        // Predicated region
        $region17: #{tpu_custom_call.1} parent=11 // pred_check
          %p429 = pneg %p86
        $region18: #{tpu_custom_call.1} parent=11 // pred_check_branch
          %431 = sbr.rel (%p429) target = $region20
        $region19: #{tpu_custom_call.1} parent=11 // pred_region
          %s432 = smul.u32 2, %s37
          %s434 = ssub.s32 128, 128
          %435 = vsyncadd [#allocation13], %s434
          %s436 = smul.addr %s432, 64
          %s437 = scalar_lea.hbm %s1, %s436
          %s438 = sshll.u32 [#allocation12], 4
          %s439 = int_to_ptr.vmem [resolvable:$true] %s438
          %444 = dma.hbm_to_vmem [thread:$0]  %s437, 128, %s439, [#allocation13], 64, 64, 4
        $region20: #{tpu_custom_call.1} parent=11 // pred_fallthru
          _
        // Predicated region
        $region21: #{tpu_custom_call.1} parent=11 // pred_check
          %p445 = pneg %p107
        $region22: #{tpu_custom_call.1} parent=11 // pred_check_branch
          %447 = sbr.rel (%p445) target = $region24
        $region23: #{tpu_custom_call.1} parent=11 // pred_region
          %s449 = ssub.s32 1024, 1024
          %450 = vsyncadd [#allocation13], %s449
          %s451 = sshll.u32 [#allocation14], 4
          %s452 = int_to_ptr.vmem [resolvable:$true] %s451
          %457 = dma.hbm_to_vmem [thread:$0]  %s2, 1024, %s452, [#allocation13], 64, 64, 4
        $region24: #{tpu_custom_call.1} parent=11 // pred_fallthru
          _
        // Predicated region
        $region25: #{tpu_custom_call.1} parent=11 // pred_check
          %p458 = pneg %p128
        $region26: #{tpu_custom_call.1} parent=11 // pred_check_branch
          %460 = sbr.rel (%p458) target = $region28
        $region27: #{tpu_custom_call.1} parent=11 // pred_region
          _
        $region28: #{tpu_custom_call.1} parent=11 // pred_fallthru
          _
        // Predicated region
        $region29: #{tpu_custom_call.1} parent=11 // pred_check
          %p461 = pneg %p149
        $region30: #{tpu_custom_call.1} parent=11 // pred_check_branch
          %463 = sbr.rel (%p461) target = $region32
        $region31: #{tpu_custom_call.1} parent=11 // pred_region
          %s465 = ssub.s32 1024, 1024
          %466 = vsyncadd [#allocation16], %s465
          %s467 = sshll.u32 [#allocation15], 4
          %s468 = int_to_ptr.vmem [resolvable:$true] %s467
          %473 = dma.hbm_to_vmem [thread:$0]  %s4, 1024, %s468, [#allocation16], 64, 64, 4
        $region32: #{tpu_custom_call.1} parent=11 // pred_fallthru
          _
        // Predicated region
        $region33: #{tpu_custom_call.1} parent=11 // pred_check
          %p474 = pneg %p170
        $region34: #{tpu_custom_call.1} parent=11 // pred_check_branch
          %476 = sbr.rel (%p474) target = $region36
        $region35: #{tpu_custom_call.1} parent=11 // pred_region
          _
        $region36: #{tpu_custom_call.1} parent=11 // pred_fallthru
          _
        // Predicated region
        $region37: #{tpu_custom_call.1} parent=11 // pred_check
          %p477 = pneg %p191
        $region38: #{tpu_custom_call.1} parent=11 // pred_check_branch
          %479 = sbr.rel (%p477) target = $region40
        $region39: #{tpu_custom_call.1} parent=11 // pred_region
          _
        $region40: #{tpu_custom_call.1} parent=11 // pred_fallthru
          _
        // Predicated region
        $region41: #{tpu_custom_call.1} parent=11 // pred_check
          %p480 = pneg %p212
        $region42: #{tpu_custom_call.1} parent=11 // pred_check_branch
          %482 = sbr.rel (%p480) target = $region44
        $region43: #{tpu_custom_call.1} parent=11 // pred_region
          _
        $region44: #{tpu_custom_call.1} parent=11 // pred_fallthru
          _
        // Predicated region
        $region45: #{tpu_custom_call.1} parent=11 // pred_check
          %p483 = pneg %p233
        $region46: #{tpu_custom_call.1} parent=11 // pred_check_branch
          %485 = sbr.rel (%p483) target = $region48
        $region47: #{tpu_custom_call.1} parent=11 // pred_region
          %s487 = ssub.s32 1024, 1024
          %488 = vsyncadd [#allocation16], %s487
          %s489 = sshll.u32 [#allocation17], 4
          %s490 = int_to_ptr.vmem [resolvable:$true] %s489
          %495 = dma.hbm_to_vmem [thread:$0]  %s8, 1024, %s490, [#allocation16], 64, 64, 4
        $region48: #{tpu_custom_call.1} parent=11 // pred_fallthru
          _
        // Predicated region
        $region49: #{tpu_custom_call.1} parent=11 // pred_check
          %p496 = pneg %p254
        $region50: #{tpu_custom_call.1} parent=11 // pred_check_branch
          %498 = sbr.rel (%p496) target = $region52
        $region51: #{tpu_custom_call.1} parent=11 // pred_region
          _
        $region52: #{tpu_custom_call.1} parent=11 // pred_fallthru
          _
        // Predicated region
        $region53: #{tpu_custom_call.1} parent=11 // pred_check
          %p499 = pneg %p275
        $region54: #{tpu_custom_call.1} parent=11 // pred_check_branch
          %501 = sbr.rel (%p499) target = $region56
        $region55: #{tpu_custom_call.1} parent=11 // pred_region
          %s503 = ssub.s32 1024, 1024
          %504 = vsyncadd [#allocation19], %s503
          %s505 = sshll.u32 [#allocation18], 4
          %s506 = int_to_ptr.vmem [resolvable:$true] %s505
          %511 = dma.hbm_to_vmem [thread:$0]  %s10, 1024, %s506, [#allocation19], 64, 64, 4
        $region56: #{tpu_custom_call.1} parent=11 // pred_fallthru
          _
        // Predicated region
        $region57: #{tpu_custom_call.1} parent=11 // pred_check
          %p512 = pneg %p296
        $region58: #{tpu_custom_call.1} parent=11 // pred_check_branch
          %514 = sbr.rel (%p512) target = $region60
        $region59: #{tpu_custom_call.1} parent=11 // pred_region
          _
        $region60: #{tpu_custom_call.1} parent=11 // pred_fallthru
          _
        // Predicated region
        $region61: #{tpu_custom_call.1} parent=11 // pred_check
          %p515 = pneg %p317
        $region62: #{tpu_custom_call.1} parent=11 // pred_check_branch
          %517 = sbr.rel (%p515) target = $region64
        $region63: #{tpu_custom_call.1} parent=11 // pred_region
          _
        $region64: #{tpu_custom_call.1} parent=11 // pred_fallthru
          _
        // Predicated region
        $region65: #{tpu_custom_call.1} parent=11 // pred_check
          %p518 = pneg %p338
        $region66: #{tpu_custom_call.1} parent=11 // pred_check_branch
          %520 = sbr.rel (%p518) target = $region68
        $region67: #{tpu_custom_call.1} parent=11 // pred_region
          _
        $region68: #{tpu_custom_call.1} parent=11 // pred_fallthru
          _
        // Predicated region
        $region69: #{tpu_custom_call.1} parent=11 // pred_check
          %p521 = pneg %p359
        $region70: #{tpu_custom_call.1} parent=11 // pred_check_branch
          %523 = sbr.rel (%p521) target = $region72
        $region71: #{tpu_custom_call.1} parent=11 // pred_region
          _
        $region72: #{tpu_custom_call.1} parent=11 // pred_fallthru
          _
        // Predicated region
        $region73: #{tpu_custom_call.1} parent=11 // pred_check
          %p524 = pneg %p380
        $region74: #{tpu_custom_call.1} parent=11 // pred_check_branch
          %526 = sbr.rel (%p524) target = $region76
        $region75: #{tpu_custom_call.1} parent=11 // pred_region
          _
        $region76: #{tpu_custom_call.1} parent=11 // pred_fallthru
          _
      $region12: #{tpu_custom_call.1} parent=5 // pred_fallthru
        _
      %p527 = scmp.lt.s32.totalorder %s27, 2
      // Predicated region
      $region77: #{tpu_custom_call.1} parent=5 // pred_check
        %p528 = pneg %p527
      $region78: #{tpu_custom_call.1} parent=5 // pred_check_branch
        %530 = sbr.rel (%p528) target = $region80
      $region79: #{tpu_custom_call.1} parent=5 // pred_region
        _
      $region80: #{tpu_custom_call.1} parent=5 // pred_fallthru
        _
      %p531 = scmp.le.s32.totalorder 1, %s27
      %p532 = scmp.lt.s32.totalorder %s27, 3
      %p533 = pnand %p531, %p532
      %p534 = pneg %p533
      // Predicated region
      $region81: #{tpu_custom_call.1} parent=5 // pred_check
        _
      $region82: #{tpu_custom_call.1} parent=5 // pred_check_branch
        %536 = sbr.rel (%p533) target = $region84
      $region83: #{tpu_custom_call.1} parent=5 // pred_region
        %s537 = ssub.s32 %s27, 1
        // Predicated region
        $region85: #{tpu_custom_call.1} parent=83 // pred_check
          %p538 = pneg %p60
        $region86: #{tpu_custom_call.1} parent=83 // pred_check_branch
          %540 = sbr.rel (%p538) target = $region88
        $region87: #{tpu_custom_call.1} parent=83 // pred_region
          %541 = dma.done [#allocation10], 256
        $region88: #{tpu_custom_call.1} parent=83 // pred_fallthru
          _
        // Predicated region
        $region89: #{tpu_custom_call.1} parent=83 // pred_check
          %p542 = pneg %p86
        $region90: #{tpu_custom_call.1} parent=83 // pred_check_branch
          %544 = sbr.rel (%p542) target = $region92
        $region91: #{tpu_custom_call.1} parent=83 // pred_region
          %545 = dma.done [#allocation13], 128
        $region92: #{tpu_custom_call.1} parent=83 // pred_fallthru
          _
        // Predicated region
        $region93: #{tpu_custom_call.1} parent=83 // pred_check
          %p546 = pneg %p107
        $region94: #{tpu_custom_call.1} parent=83 // pred_check_branch
          %548 = sbr.rel (%p546) target = $region96
        $region95: #{tpu_custom_call.1} parent=83 // pred_region
          %549 = dma.done [#allocation13], 1024
        $region96: #{tpu_custom_call.1} parent=83 // pred_fallthru
          _
        // Predicated region
        $region97: #{tpu_custom_call.1} parent=83 // pred_check
          %p550 = pneg %p149
        $region98: #{tpu_custom_call.1} parent=83 // pred_check_branch
          %552 = sbr.rel (%p550) target = $region100
        $region99: #{tpu_custom_call.1} parent=83 // pred_region
          %553 = dma.done [#allocation16], 1024
        $region100: #{tpu_custom_call.1} parent=83 // pred_fallthru
          _
        // Predicated region
        $region101: #{tpu_custom_call.1} parent=83 // pred_check
          %p554 = pneg %p233
        $region102: #{tpu_custom_call.1} parent=83 // pred_check_branch
          %556 = sbr.rel (%p554) target = $region104
        $region103: #{tpu_custom_call.1} parent=83 // pred_region
          %557 = dma.done [#allocation16], 1024
        $region104: #{tpu_custom_call.1} parent=83 // pred_fallthru
          _
        // Predicated region
        $region105: #{tpu_custom_call.1} parent=83 // pred_check
          %p558 = pneg %p275
        $region106: #{tpu_custom_call.1} parent=83 // pred_check_branch
          %560 = sbr.rel (%p558) target = $region108
        $region107: #{tpu_custom_call.1} parent=83 // pred_region
          %561 = dma.done [#allocation19], 1024
        $region108: #{tpu_custom_call.1} parent=83 // pred_fallthru
          _
        %p562 = pneg %p60
        %p563 = pneg %p57
        %p564 = pneg %p86
        %p565 = pneg %p83
        %p566 = pneg %p107
        %p567 = pneg %p104
        %p568 = pneg %p128
        %p569 = pneg %p125
        %p570 = pneg %p149
        %p571 = pneg %p146
        %p572 = pneg %p170
        %p573 = pneg %p167
        %p574 = pneg %p191
        %p575 = pneg %p188
        %p576 = pneg %p212
        %p577 = pneg %p209
        %p578 = pneg %p233
        %p579 = pneg %p230
        %p580 = pneg %p254
        %p581 = pneg %p251
        %p582 = pneg %p275
        %p583 = pneg %p272
        %p584 = pneg %p296
        %p585 = pneg %p293
        %p586 = pneg %p317
        %p587 = pneg %p314
        %p588 = pneg %p338
        %p589 = pneg %p335
        %p590 = pneg %p359
        %p591 = pneg %p356
        %p592 = pneg %p380
        %p593 = pneg %p377
        %p594 = pneg %p401
        %p595 = pneg %p398
        %s596 = smul.u32 2, %s37
        %s598 = smul.u32 %s37, 16
        %p599 = scmp.eq.s32.totalorder %s36, 0
        %p600 = scmp.eq.s32.totalorder %s37, 0
        %p601 = pnand %p599, %p600
        %p602 = pneg %p601
        // Predicated region
        $region109: #{tpu_custom_call.1} parent=83 // pred_check
          _
        $region110: #{tpu_custom_call.1} parent=83 // pred_check_branch
          %604 = sbr.rel (%p601) target = $region112
        $region111: #{tpu_custom_call.1} parent=83 // pred_region
          %v605 = vld [vmem:[#allocation9] sm:$0xff]
          %v606 = vld [vmem:[#allocation9 + $0x8] sm:$0xff]
          %v607 = vpack.c.bf16 %v606, %v605
          %v608 = vld [vmem:[#allocation14] sm:$0xf]
          %v609 = vld [vmem:[#allocation14 + $0x4] sm:$0xf]
          %v610 = vld [vmem:[#allocation14 + $0x8] sm:$0xf]
          %v611 = vld [vmem:[#allocation14 + $0xc] sm:$0xf]
          %v612 = vld [vmem:[#allocation14 + $0x10] sm:$0xf]
          %v613 = vld [vmem:[#allocation14 + $0x14] sm:$0xf]
          %v614 = vld [vmem:[#allocation14 + $0x18] sm:$0xf]
          %v615 = vld [vmem:[#allocation14 + $0x1c] sm:$0xf]
          %v616 = vld [vmem:[#allocation14 + $0x20] sm:$0xf]
          %v617 = vld [vmem:[#allocation14 + $0x24] sm:$0xf]
          %v618 = vld [vmem:[#allocation14 + $0x28] sm:$0xf]
          %v619 = vld [vmem:[#allocation14 + $0x2c] sm:$0xf]
          %v620 = vld [vmem:[#allocation14 + $0x30] sm:$0xf]
          %v621 = vld [vmem:[#allocation14 + $0x34] sm:$0xf]
          %v622 = vld [vmem:[#allocation14 + $0x38] sm:$0xf]
          %v623 = vld [vmem:[#allocation14 + $0x3c] sm:$0xf]
          %v640 = vunpack.c.l.b16 %v608
          %v641 = vunpack.c.l.b16 %v609
          %v642 = vunpack.c.l.b16 %v610
          %v643 = vunpack.c.l.b16 %v611
          %v644 = vunpack.c.l.b16 %v612
          %v645 = vunpack.c.l.b16 %v613
          %v646 = vunpack.c.l.b16 %v614
          %v647 = vunpack.c.l.b16 %v615
          %v648 = vunpack.c.l.b16 %v616
          %v649 = vunpack.c.l.b16 %v617
          %v650 = vunpack.c.l.b16 %v618
          %v651 = vunpack.c.l.b16 %v619
          %v652 = vunpack.c.l.b16 %v620
          %v653 = vunpack.c.l.b16 %v621
          %v654 = vunpack.c.l.b16 %v622
          %v655 = vunpack.c.l.b16 %v623
          %v656 = vpack.c.b16 %v641, %v640
          %v657 = vpack.c.b16 %v643, %v642
          %v658 = vpack.c.b16 %v645, %v644
          %v659 = vpack.c.b16 %v647, %v646
          %v660 = vpack.c.b16 %v649, %v648
          %v661 = vpack.c.b16 %v651, %v650
          %v662 = vpack.c.b16 %v653, %v652
          %v663 = vpack.c.b16 %v655, %v654
          %672 = vmatprep.subr.bf16.mxu0 0
          %673 = vmatpush1.bf16.msra.mxu0 %v656
          %674 = vmatprep.subr.bf16.mxu0 0
          %675 = vmatpush1.bf16.msra.mxu0 %v657
          %676 = vmatprep.subr.bf16.mxu0 0
          %677 = vmatpush1.bf16.msra.mxu0 %v658
          %678 = vmatprep.subr.bf16.mxu0 0
          %679 = vmatpush1.bf16.msra.mxu0 %v659
          %680 = vmatprep.subr.bf16.mxu0 0
          %681 = vmatpush1.bf16.msra.mxu0 %v660
          %682 = vmatprep.subr.bf16.mxu0 0
          %683 = vmatpush1.bf16.msra.mxu0 %v661
          %684 = vmatprep.subr.bf16.mxu0 0
          %685 = vmatpush1.bf16.msra.mxu0 %v662
          %686 = vmatprep.subr.bf16.mxu0 0
          %687 = vmatpush1.bf16.msra.mxu0 %v663
          %688 = vmatprep.subr.bf16.mxu0 0
          %689 = vmatpush1.bf16.msra.mxu0 0
          %690 = vmatprep.subr.bf16.mxu0 0
          %691 = vmatpush1.bf16.msra.mxu0 0
          %692 = vmatprep.subr.bf16.mxu0 0
          %693 = vmatpush1.bf16.msra.mxu0 0
          %694 = vmatprep.subr.bf16.mxu0 0
          %695 = vmatpush1.bf16.msra.mxu0 0
          %696 = vmatprep.subr.bf16.mxu0 0
          %697 = vmatpush1.bf16.msra.mxu0 0
          %698 = vmatprep.subr.bf16.mxu0 0
          %699 = vmatpush1.bf16.msra.mxu0 0
          %700 = vmatprep.subr.bf16.mxu0 0
          %701 = vmatpush1.bf16.msra.mxu0 0
          %702 = vmatprep.subr.bf16.mxu0 0
          %703 = vmatpush1.bf16.msra.mxu0 0
          %704 = vmatprep.mubr.bf16.mxu0 0
          %705 = vmatmul.mubr.bf16.gmra.mrb[0].mxu0 %v607
          %v706 = vpop.f32.mrb[0].mxu0
          %v707 = vadd.f32 0.0, %v706
          %v708 = vpop.f32.mrb[0].mxu0
          %v709 = vpop.f32.mrb[0].mxu0
          %v710 = vadd.f32 0.0, %v709
          %v711 = vpop.f32.mrb[0].mxu0
          %712 = vdwg.mxu0
          %713 = vst [vmem:[#allocation2] sm:$0xff] %v707
          %714 = vst [vmem:[#allocation2 + $0x8] sm:$0xff] %v710
          %715 = vst [vmem:[#allocation5] sm:$0x1] 0.0
          %716 = vst [vmem:[#allocation6] sm:$0x1] 0.0
          %717 = vst [vmem:[#allocation7] sm:$0x1] 0.0
          %718 = vst [vmem:[#allocation8] sm:$0x1] 0.0
        $region112: #{tpu_custom_call.1} parent=83 // pred_fallthru
          _
        %v719 = vld [vmem:[#allocation12] sm:$0xf]
        %v720 = vld [vmem:[#allocation12 + $0x4] sm:$0xf]
        // Predicated region
        $region113: #{tpu_custom_call.1} parent=83 // pred_check
          %p721 = pneg %p599
        $region114: #{tpu_custom_call.1} parent=83 // pred_check_branch
          %723 = sbr.rel (%p721) target = $region116
        $region115: #{tpu_custom_call.1} parent=83 // pred_region
          %v724 = vld [vmem:[#allocation2] sm:$0xff]
          %v725 = vld [vmem:[#allocation2 + $0x8] sm:$0xff]
          %v726 = vpack.c.bf16 %v725, %v724
          %v727 = vld [vmem:[%s3] sm:$0x1]
          %v729 = vlaneseq
          %v730 = vshrl.u32 %v729, 7
          %v731 = vsub.s32 0, %v730
          %v732 = vrot.slane %v727, %v731
          %v736 = vunpack.c.l.b16 %v719
          %v737 = vunpack.c.l.b16 %v720
          %v738 = vpack.c.b16 %v737, %v736
          %vm739 = vcmask 130048
          %v741 = vsel %vm739, %v738, 0
          %743 = vmatprep.subr.bf16.mxu0 0
          %744 = vmatpush1.bf16.msra.mxu0 %v726
          %745 = vmatprep.subr.bf16.mxu0 0
          %746 = vmatpush1.bf16.msra.mxu0 0
          %747 = vmatprep.subr.bf16.mxu0 0
          %748 = vmatpush1.bf16.msra.mxu0 0
          %749 = vmatprep.subr.bf16.mxu0 0
          %750 = vmatpush1.bf16.msra.mxu0 0
          %751 = vmatprep.subr.bf16.mxu0 0
          %752 = vmatpush1.bf16.msra.mxu0 0
          %753 = vmatprep.subr.bf16.mxu0 0
          %754 = vmatpush1.bf16.msra.mxu0 0
          %755 = vmatprep.subr.bf16.mxu0 0
          %756 = vmatpush1.bf16.msra.mxu0 0
          %757 = vmatprep.subr.bf16.mxu0 0
          %758 = vmatpush1.bf16.msra.mxu0 0
          %759 = vmatprep.subr.bf16.mxu0 0
          %760 = vmatpush1.bf16.msra.mxu0 0
          %761 = vmatprep.subr.bf16.mxu0 0
          %762 = vmatpush1.bf16.msra.mxu0 0
          %763 = vmatprep.subr.bf16.mxu0 0
          %764 = vmatpush1.bf16.msra.mxu0 0
          %765 = vmatprep.subr.bf16.mxu0 0
          %766 = vmatpush1.bf16.msra.mxu0 0
          %767 = vmatprep.subr.bf16.mxu0 0
          %768 = vmatpush1.bf16.msra.mxu0 0
          %769 = vmatprep.subr.bf16.mxu0 0
          %770 = vmatpush1.bf16.msra.mxu0 0
          %771 = vmatprep.subr.bf16.mxu0 0
          %772 = vmatpush1.bf16.msra.mxu0 0
          %773 = vmatprep.subr.bf16.mxu0 0
          %774 = vmatpush1.bf16.msra.mxu0 0
          %775 = vmatprep.mubr.bf16.mxu0 0
          %776 = vmatmul.mubr.bf16.gmra.mrb[0].mxu0 %v741
          %v777 = vpop.f32.mrb[0].mxu0
          %v778 = vadd.f32 %v732, %v777
          %v779 = vpop.f32.mrb[0].mxu0
          %v780 = vpop.f32.mrb[0].mxu0
          %v781 = vadd.f32 %v732, %v780
          %v782 = vpop.f32.mrb[0].mxu0
          %783 = vdwg.mxu0
          %v784 = vmax.f32 %v778, 0.0
          %v785 = vmax.f32 %v781, 0.0
          %v786 = vpack.c.bf16 %v785, %v784
          %v787 = vld [vmem:[#allocation15] sm:$0xf]
          %v788 = vld [vmem:[#allocation15 + $0x4] sm:$0xf]
          %v789 = vld [vmem:[#allocation15 + $0x8] sm:$0xf]
          %v790 = vld [vmem:[#allocation15 + $0xc] sm:$0xf]
          %v791 = vld [vmem:[#allocation15 + $0x10] sm:$0xf]
          %v792 = vld [vmem:[#allocation15 + $0x14] sm:$0xf]
          %v793 = vld [vmem:[#allocation15 + $0x18] sm:$0xf]
          %v794 = vld [vmem:[#allocation15 + $0x1c] sm:$0xf]
          %v795 = vld [vmem:[#allocation15 + $0x20] sm:$0xf]
          %v796 = vld [vmem:[#allocation15 + $0x24] sm:$0xf]
          %v797 = vld [vmem:[#allocation15 + $0x28] sm:$0xf]
          %v798 = vld [vmem:[#allocation15 + $0x2c] sm:$0xf]
          %v799 = vld [vmem:[#allocation15 + $0x30] sm:$0xf]
          %v800 = vld [vmem:[#allocation15 + $0x34] sm:$0xf]
          %v801 = vld [vmem:[#allocation15 + $0x38] sm:$0xf]
          %v802 = vld [vmem:[#allocation15 + $0x3c] sm:$0xf]
          %v803 = vld [vmem:[%s5] sm:$0x1]
          %v805 = vlaneseq
          %v806 = vshrl.u32 %v805, 7
          %v807 = vsub.s32 0, %v806
          %v808 = vrot.slane %v803, %v807
          %v826 = vunpack.c.l.b16 %v787
          %v827 = vunpack.c.l.b16 %v788
          %v828 = vunpack.c.l.b16 %v789
          %v829 = vunpack.c.l.b16 %v790
          %v830 = vunpack.c.l.b16 %v791
          %v831 = vunpack.c.l.b16 %v792
          %v832 = vunpack.c.l.b16 %v793
          %v833 = vunpack.c.l.b16 %v794
          %v834 = vunpack.c.l.b16 %v795
          %v835 = vunpack.c.l.b16 %v796
          %v836 = vunpack.c.l.b16 %v797
          %v837 = vunpack.c.l.b16 %v798
          %v838 = vunpack.c.l.b16 %v799
          %v839 = vunpack.c.l.b16 %v800
          %v840 = vunpack.c.l.b16 %v801
          %v841 = vunpack.c.l.b16 %v802
          %v842 = vpack.c.b16 %v827, %v826
          %v843 = vpack.c.b16 %v829, %v828
          %v844 = vpack.c.b16 %v831, %v830
          %v845 = vpack.c.b16 %v833, %v832
          %v846 = vpack.c.b16 %v835, %v834
          %v847 = vpack.c.b16 %v837, %v836
          %v848 = vpack.c.b16 %v839, %v838
          %v849 = vpack.c.b16 %v841, %v840
          %858 = vmatprep.subr.bf16.mxu0 0
          %859 = vmatpush1.bf16.msra.mxu0 %v842
          %860 = vmatprep.subr.bf16.mxu0 0
          %861 = vmatpush1.bf16.msra.mxu0 %v843
          %862 = vmatprep.subr.bf16.mxu0 0
          %863 = vmatpush1.bf16.msra.mxu0 %v844
          %864 = vmatprep.subr.bf16.mxu0 0
          %865 = vmatpush1.bf16.msra.mxu0 %v845
          %866 = vmatprep.subr.bf16.mxu0 0
          %867 = vmatpush1.bf16.msra.mxu0 %v846
          %868 = vmatprep.subr.bf16.mxu0 0
          %869 = vmatpush1.bf16.msra.mxu0 %v847
          %870 = vmatprep.subr.bf16.mxu0 0
          %871 = vmatpush1.bf16.msra.mxu0 %v848
          %872 = vmatprep.subr.bf16.mxu0 0
          %873 = vmatpush1.bf16.msra.mxu0 %v849
          %874 = vmatprep.subr.bf16.mxu0 0
          %875 = vmatpush1.bf16.msra.mxu0 0
          %876 = vmatprep.subr.bf16.mxu0 0
          %877 = vmatpush1.bf16.msra.mxu0 0
          %878 = vmatprep.subr.bf16.mxu0 0
          %879 = vmatpush1.bf16.msra.mxu0 0
          %880 = vmatprep.subr.bf16.mxu0 0
          %881 = vmatpush1.bf16.msra.mxu0 0
          %882 = vmatprep.subr.bf16.mxu0 0
          %883 = vmatpush1.bf16.msra.mxu0 0
          %884 = vmatprep.subr.bf16.mxu0 0
          %885 = vmatpush1.bf16.msra.mxu0 0
          %886 = vmatprep.subr.bf16.mxu0 0
          %887 = vmatpush1.bf16.msra.mxu0 0
          %888 = vmatprep.subr.bf16.mxu0 0
          %889 = vmatpush1.bf16.msra.mxu0 0
          %890 = vmatprep.mubr.bf16.mxu0 0
          %891 = vmatmul.mubr.bf16.gmra.mrb[0].mxu0 %v786
          %v892 = vpop.f32.mrb[0].mxu0
          %v893 = vadd.f32 %v808, %v892
          %v894 = vpop.f32.mrb[0].mxu0
          %v895 = vpop.f32.mrb[0].mxu0
          %v896 = vadd.f32 %v808, %v895
          %v897 = vpop.f32.mrb[0].mxu0
          %898 = vdwg.mxu0
          %v899 = vmax.f32 %v893, 0.0
          %v900 = vmax.f32 %v896, 0.0
          %s901 = scalar_lea.vmem [#allocation3], %s598
          %902 = vst [vmem:[%s901] sm:$0xff] %v899
          %903 = vst [vmem:[%s901 + $0x8] sm:$0xff] %v900
          %v904 = vld [vmem:[#allocation5] sm:$0x1]
          %v905 = vadd.f32 %v899, %v900
          %v906 = vrot.slane %v905, 4
          %v907 = vadd.f32 %v905, %v906
          %v908 = vrot.slane %v907, 2
          %v909 = vadd.f32 %v907, %v908
          %v910 = vrot.slane %v909, 1
          %v911 = vadd.f32 %v909, %v910
          %v912 = vadd.f32 %v904, %v911
          %913 = vst [vmem:[#allocation5] sm:$0x1] %v912
          %v914 = vld [vmem:[#allocation6] sm:$0x1]
          %v915 = vmul.f32 %v899, %v899
          %v916 = vmul.f32 %v900, %v900
          %v917 = vadd.f32 %v915, %v916
          %v918 = vrot.slane %v917, 4
          %v919 = vadd.f32 %v917, %v918
          %v920 = vrot.slane %v919, 2
          %v921 = vadd.f32 %v919, %v920
          %v922 = vrot.slane %v921, 1
          %v923 = vadd.f32 %v921, %v922
          %v924 = vadd.f32 %v914, %v923
          %925 = vst [vmem:[#allocation6] sm:$0x1] %v924
        $region116: #{tpu_custom_call.1} parent=83 // pred_fallthru
          _
        // Predicated region
        $region117: #{tpu_custom_call.1} parent=83 // pred_check
          _
        $region118: #{tpu_custom_call.1} parent=83 // pred_check_branch
          %927 = sbr.rel (%p601) target = $region120
        $region119: #{tpu_custom_call.1} parent=83 // pred_region
          %v928 = vld [vmem:[#allocation5] sm:$0x1]
          %v929 = vmul.f32 %v928, 0.0625
          %v930 = vld [vmem:[#allocation6] sm:$0x1]
          %v931 = vmul.f32 %v930, 0.0625
          %v932 = vmul.f32 %v929, %v929
          %v933 = vsub.f32 %v931, %v932
          %v934 = vmax.f32 %v933, 0.0
          %v935 = vld [vmem:[%s6] sm:$0x1]
          %v936 = vadd.f32 %v934, 1e-05
          %v937 = vrsqrt.pop %v936
          %v938 = vmul.f32 %v935, %v937
          %v939 = vld [vmem:[%s7] sm:$0x1]
          %v940 = vmul.f32 %v929, %v938
          %v941 = vsub.f32 %v939, %v940
          %v942 = vld [vmem:[#allocation3] sm:$0xff]
          %v943 = vld [vmem:[#allocation3 + $0x8] sm:$0xff]
          %v945 = vlaneseq
          %v946 = vshrl.u32 %v945, 7
          %v947 = vsub.s32 0, %v946
          %v948 = vrot.slane %v938, %v947
          %v950 = vmul.f32 %v942, %v948
          %v951 = vmul.f32 %v943, %v948
          %v953 = vlaneseq
          %v954 = vshrl.u32 %v953, 7
          %v955 = vsub.s32 0, %v954
          %v956 = vrot.slane %v941, %v955
          %v958 = vadd.f32 %v950, %v956
          %v959 = vadd.f32 %v951, %v956
          %960 = vst [vmem:[#allocation3] sm:$0xff] %v958
          %961 = vst [vmem:[#allocation3 + $0x8] sm:$0xff] %v959
        $region120: #{tpu_custom_call.1} parent=83 // pred_fallthru
          _
        %p962 = scmp.eq.s32.totalorder %s36, 1
        // Predicated region
        $region121: #{tpu_custom_call.1} parent=83 // pred_check
          %p963 = pneg %p962
        $region122: #{tpu_custom_call.1} parent=83 // pred_check_branch
          %965 = sbr.rel (%p963) target = $region124
        $region123: #{tpu_custom_call.1} parent=83 // pred_region
          %v966 = vld [vmem:[#allocation3] sm:$0xff]
          %v967 = vld [vmem:[#allocation3 + $0x8] sm:$0xff]
          %v968 = vpack.c.bf16 %v967, %v966
          %v971 = vunpack.c.l.b16 %v719
          %v972 = vunpack.c.l.b16 %v720
          %v973 = vpack.c.b16 %v972, %v971
          %vm974 = vcmask 130048
          %v976 = vsel %vm974, %v973, 0
          %978 = vmatprep.subr.bf16.mxu0 0
          %979 = vmatpush1.bf16.msra.mxu0 %v968
          %980 = vmatprep.subr.bf16.mxu0 0
          %981 = vmatpush1.bf16.msra.mxu0 0
          %982 = vmatprep.subr.bf16.mxu0 0
          %983 = vmatpush1.bf16.msra.mxu0 0
          %984 = vmatprep.subr.bf16.mxu0 0
          %985 = vmatpush1.bf16.msra.mxu0 0
          %986 = vmatprep.subr.bf16.mxu0 0
          %987 = vmatpush1.bf16.msra.mxu0 0
          %988 = vmatprep.subr.bf16.mxu0 0
          %989 = vmatpush1.bf16.msra.mxu0 0
          %990 = vmatprep.subr.bf16.mxu0 0
          %991 = vmatpush1.bf16.msra.mxu0 0
          %992 = vmatprep.subr.bf16.mxu0 0
          %993 = vmatpush1.bf16.msra.mxu0 0
          %994 = vmatprep.subr.bf16.mxu0 0
          %995 = vmatpush1.bf16.msra.mxu0 0
          %996 = vmatprep.subr.bf16.mxu0 0
          %997 = vmatpush1.bf16.msra.mxu0 0
          %998 = vmatprep.subr.bf16.mxu0 0
          %999 = vmatpush1.bf16.msra.mxu0 0
          %1000 = vmatprep.subr.bf16.mxu0 0
          %1001 = vmatpush1.bf16.msra.mxu0 0
          %1002 = vmatprep.subr.bf16.mxu0 0
          %1003 = vmatpush1.bf16.msra.mxu0 0
          %1004 = vmatprep.subr.bf16.mxu0 0
          %1005 = vmatpush1.bf16.msra.mxu0 0
          %1006 = vmatprep.subr.bf16.mxu0 0
          %1007 = vmatpush1.bf16.msra.mxu0 0
          %1008 = vmatprep.subr.bf16.mxu0 0
          %1009 = vmatpush1.bf16.msra.mxu0 0
          %1010 = vmatprep.mubr.bf16.mxu0 0
          %1011 = vmatmul.mubr.bf16.gmra.mrb[0].mxu0 %v976
          %v1012 = vpop.f32.mrb[0].mxu0
          %v1013 = vadd.f32 0.0, %v1012
          %v1014 = vpop.f32.mrb[0].mxu0
          %v1015 = vpop.f32.mrb[0].mxu0
          %v1016 = vadd.f32 0.0, %v1015
          %v1017 = vpop.f32.mrb[0].mxu0
          %1018 = vdwg.mxu0
          %v1019 = vpack.c.bf16 %v1016, %v1013
          %v1020 = vld [vmem:[#allocation17] sm:$0xf]
          %v1021 = vld [vmem:[#allocation17 + $0x4] sm:$0xf]
          %v1022 = vld [vmem:[#allocation17 + $0x8] sm:$0xf]
          %v1023 = vld [vmem:[#allocation17 + $0xc] sm:$0xf]
          %v1024 = vld [vmem:[#allocation17 + $0x10] sm:$0xf]
          %v1025 = vld [vmem:[#allocation17 + $0x14] sm:$0xf]
          %v1026 = vld [vmem:[#allocation17 + $0x18] sm:$0xf]
          %v1027 = vld [vmem:[#allocation17 + $0x1c] sm:$0xf]
          %v1028 = vld [vmem:[#allocation17 + $0x20] sm:$0xf]
          %v1029 = vld [vmem:[#allocation17 + $0x24] sm:$0xf]
          %v1030 = vld [vmem:[#allocation17 + $0x28] sm:$0xf]
          %v1031 = vld [vmem:[#allocation17 + $0x2c] sm:$0xf]
          %v1032 = vld [vmem:[#allocation17 + $0x30] sm:$0xf]
          %v1033 = vld [vmem:[#allocation17 + $0x34] sm:$0xf]
          %v1034 = vld [vmem:[#allocation17 + $0x38] sm:$0xf]
          %v1035 = vld [vmem:[#allocation17 + $0x3c] sm:$0xf]
          %v1036 = vld [vmem:[%s9] sm:$0x1]
          %v1038 = vlaneseq
          %v1039 = vshrl.u32 %v1038, 7
          %v1040 = vsub.s32 0, %v1039
          %v1041 = vrot.slane %v1036, %v1040
          %v1059 = vunpack.c.l.b16 %v1020
          %v1060 = vunpack.c.l.b16 %v1021
          %v1061 = vunpack.c.l.b16 %v1022
          %v1062 = vunpack.c.l.b16 %v1023
          %v1063 = vunpack.c.l.b16 %v1024
          %v1064 = vunpack.c.l.b16 %v1025
          %v1065 = vunpack.c.l.b16 %v1026
          %v1066 = vunpack.c.l.b16 %v1027
          %v1067 = vunpack.c.l.b16 %v1028
          %v1068 = vunpack.c.l.b16 %v1029
          %v1069 = vunpack.c.l.b16 %v1030
          %v1070 = vunpack.c.l.b16 %v1031
          %v1071 = vunpack.c.l.b16 %v1032
          %v1072 = vunpack.c.l.b16 %v1033
          %v1073 = vunpack.c.l.b16 %v1034
          %v1074 = vunpack.c.l.b16 %v1035
          %v1075 = vpack.c.b16 %v1060, %v1059
          %v1076 = vpack.c.b16 %v1062, %v1061
          %v1077 = vpack.c.b16 %v1064, %v1063
          %v1078 = vpack.c.b16 %v1066, %v1065
          %v1079 = vpack.c.b16 %v1068, %v1067
          %v1080 = vpack.c.b16 %v1070, %v1069
          %v1081 = vpack.c.b16 %v1072, %v1071
          %v1082 = vpack.c.b16 %v1074, %v1073
          %1091 = vmatprep.subr.bf16.mxu0 0
          %1092 = vmatpush1.bf16.msra.mxu0 %v1075
          %1093 = vmatprep.subr.bf16.mxu0 0
          %1094 = vmatpush1.bf16.msra.mxu0 %v1076
          %1095 = vmatprep.subr.bf16.mxu0 0
          %1096 = vmatpush1.bf16.msra.mxu0 %v1077
          %1097 = vmatprep.subr.bf16.mxu0 0
          %1098 = vmatpush1.bf16.msra.mxu0 %v1078
          %1099 = vmatprep.subr.bf16.mxu0 0
          %1100 = vmatpush1.bf16.msra.mxu0 %v1079
          %1101 = vmatprep.subr.bf16.mxu0 0
          %1102 = vmatpush1.bf16.msra.mxu0 %v1080
          %1103 = vmatprep.subr.bf16.mxu0 0
          %1104 = vmatpush1.bf16.msra.mxu0 %v1081
          %1105 = vmatprep.subr.bf16.mxu0 0
          %1106 = vmatpush1.bf16.msra.mxu0 %v1082
          %1107 = vmatprep.subr.bf16.mxu0 0
          %1108 = vmatpush1.bf16.msra.mxu0 0
          %1109 = vmatprep.subr.bf16.mxu0 0
          %1110 = vmatpush1.bf16.msra.mxu0 0
          %1111 = vmatprep.subr.bf16.mxu0 0
          %1112 = vmatpush1.bf16.msra.mxu0 0
          %1113 = vmatprep.subr.bf16.mxu0 0
          %1114 = vmatpush1.bf16.msra.mxu0 0
          %1115 = vmatprep.subr.bf16.mxu0 0
          %1116 = vmatpush1.bf16.msra.mxu0 0
          %1117 = vmatprep.subr.bf16.mxu0 0
          %1118 = vmatpush1.bf16.msra.mxu0 0
          %1119 = vmatprep.subr.bf16.mxu0 0
          %1120 = vmatpush1.bf16.msra.mxu0 0
          %1121 = vmatprep.subr.bf16.mxu0 0
          %1122 = vmatpush1.bf16.msra.mxu0 0
          %1123 = vmatprep.mubr.bf16.mxu0 0
          %1124 = vmatmul.mubr.bf16.gmra.mrb[0].mxu0 %v1019
          %v1125 = vpop.f32.mrb[0].mxu0
          %v1126 = vadd.f32 %v1041, %v1125
          %v1127 = vpop.f32.mrb[0].mxu0
          %v1128 = vpop.f32.mrb[0].mxu0
          %v1129 = vadd.f32 %v1041, %v1128
          %v1130 = vpop.f32.mrb[0].mxu0
          %1131 = vdwg.mxu0
          %v1132 = vmax.f32 %v1126, 0.0
          %v1133 = vmax.f32 %v1129, 0.0
          %v1134 = vpack.c.bf16 %v1133, %v1132
          %v1135 = vld [vmem:[#allocation18] sm:$0xf]
          %v1136 = vld [vmem:[#allocation18 + $0x4] sm:$0xf]
          %v1137 = vld [vmem:[#allocation18 + $0x8] sm:$0xf]
          %v1138 = vld [vmem:[#allocation18 + $0xc] sm:$0xf]
          %v1139 = vld [vmem:[#allocation18 + $0x10] sm:$0xf]
          %v1140 = vld [vmem:[#allocation18 + $0x14] sm:$0xf]
          %v1141 = vld [vmem:[#allocation18 + $0x18] sm:$0xf]
          %v1142 = vld [vmem:[#allocation18 + $0x1c] sm:$0xf]
          %v1143 = vld [vmem:[#allocation18 + $0x20] sm:$0xf]
          %v1144 = vld [vmem:[#allocation18 + $0x24] sm:$0xf]
          %v1145 = vld [vmem:[#allocation18 + $0x28] sm:$0xf]
          %v1146 = vld [vmem:[#allocation18 + $0x2c] sm:$0xf]
          %v1147 = vld [vmem:[#allocation18 + $0x30] sm:$0xf]
          %v1148 = vld [vmem:[#allocation18 + $0x34] sm:$0xf]
          %v1149 = vld [vmem:[#allocation18 + $0x38] sm:$0xf]
          %v1150 = vld [vmem:[#allocation18 + $0x3c] sm:$0xf]
          %v1151 = vld [vmem:[%s11] sm:$0x1]
          %v1153 = vlaneseq
          %v1154 = vshrl.u32 %v1153, 7
          %v1155 = vsub.s32 0, %v1154
          %v1156 = vrot.slane %v1151, %v1155
          %v1174 = vunpack.c.l.b16 %v1135
          %v1175 = vunpack.c.l.b16 %v1136
          %v1176 = vunpack.c.l.b16 %v1137
          %v1177 = vunpack.c.l.b16 %v1138
          %v1178 = vunpack.c.l.b16 %v1139
          %v1179 = vunpack.c.l.b16 %v1140
          %v1180 = vunpack.c.l.b16 %v1141
          %v1181 = vunpack.c.l.b16 %v1142
          %v1182 = vunpack.c.l.b16 %v1143
          %v1183 = vunpack.c.l.b16 %v1144
          %v1184 = vunpack.c.l.b16 %v1145
          %v1185 = vunpack.c.l.b16 %v1146
          %v1186 = vunpack.c.l.b16 %v1147
          %v1187 = vunpack.c.l.b16 %v1148
          %v1188 = vunpack.c.l.b16 %v1149
          %v1189 = vunpack.c.l.b16 %v1150
          %v1190 = vpack.c.b16 %v1175, %v1174
          %v1191 = vpack.c.b16 %v1177, %v1176
          %v1192 = vpack.c.b16 %v1179, %v1178
          %v1193 = vpack.c.b16 %v1181, %v1180
          %v1194 = vpack.c.b16 %v1183, %v1182
          %v1195 = vpack.c.b16 %v1185, %v1184
          %v1196 = vpack.c.b16 %v1187, %v1186
          %v1197 = vpack.c.b16 %v1189, %v1188
          %1206 = vmatprep.subr.bf16.mxu0 0
          %1207 = vmatpush1.bf16.msra.mxu0 %v1190
          %1208 = vmatprep.subr.bf16.mxu0 0
          %1209 = vmatpush1.bf16.msra.mxu0 %v1191
          %1210 = vmatprep.subr.bf16.mxu0 0
          %1211 = vmatpush1.bf16.msra.mxu0 %v1192
          %1212 = vmatprep.subr.bf16.mxu0 0
          %1213 = vmatpush1.bf16.msra.mxu0 %v1193
          %1214 = vmatprep.subr.bf16.mxu0 0
          %1215 = vmatpush1.bf16.msra.mxu0 %v1194
          %1216 = vmatprep.subr.bf16.mxu0 0
          %1217 = vmatpush1.bf16.msra.mxu0 %v1195
          %1218 = vmatprep.subr.bf16.mxu0 0
          %1219 = vmatpush1.bf16.msra.mxu0 %v1196
          %1220 = vmatprep.subr.bf16.mxu0 0
          %1221 = vmatpush1.bf16.msra.mxu0 %v1197
          %1222 = vmatprep.subr.bf16.mxu0 0
          %1223 = vmatpush1.bf16.msra.mxu0 0
          %1224 = vmatprep.subr.bf16.mxu0 0
          %1225 = vmatpush1.bf16.msra.mxu0 0
          %1226 = vmatprep.subr.bf16.mxu0 0
          %1227 = vmatpush1.bf16.msra.mxu0 0
          %1228 = vmatprep.subr.bf16.mxu0 0
          %1229 = vmatpush1.bf16.msra.mxu0 0
          %1230 = vmatprep.subr.bf16.mxu0 0
          %1231 = vmatpush1.bf16.msra.mxu0 0
          %1232 = vmatprep.subr.bf16.mxu0 0
          %1233 = vmatpush1.bf16.msra.mxu0 0
          %1234 = vmatprep.subr.bf16.mxu0 0
          %1235 = vmatpush1.bf16.msra.mxu0 0
          %1236 = vmatprep.subr.bf16.mxu0 0
          %1237 = vmatpush1.bf16.msra.mxu0 0
          %1238 = vmatprep.mubr.bf16.mxu0 0
          %1239 = vmatmul.mubr.bf16.gmra.mrb[0].mxu0 %v1134
          %v1240 = vpop.f32.mrb[0].mxu0
          %v1241 = vadd.f32 %v1156, %v1240
          %v1242 = vpop.f32.mrb[0].mxu0
          %v1243 = vpop.f32.mrb[0].mxu0
          %v1244 = vadd.f32 %v1156, %v1243
          %v1245 = vpop.f32.mrb[0].mxu0
          %1246 = vdwg.mxu0
          %v1247 = vmax.f32 %v1241, 0.0
          %v1248 = vmax.f32 %v1244, 0.0
          %s1249 = scalar_lea.vmem [#allocation4], %s598
          %1250 = vst [vmem:[%s1249] sm:$0xff] %v1247
          %1251 = vst [vmem:[%s1249 + $0x8] sm:$0xff] %v1248
          %v1252 = vld [vmem:[#allocation7] sm:$0x1]
          %v1253 = vadd.f32 %v1247, %v1248
          %v1254 = vrot.slane %v1253, 4
          %v1255 = vadd.f32 %v1253, %v1254
          %v1256 = vrot.slane %v1255, 2
          %v1257 = vadd.f32 %v1255, %v1256
          %v1258 = vrot.slane %v1257, 1
          %v1259 = vadd.f32 %v1257, %v1258
          %v1260 = vadd.f32 %v1252, %v1259
          %1261 = vst [vmem:[#allocation7] sm:$0x1] %v1260
          %v1262 = vld [vmem:[#allocation8] sm:$0x1]
          %v1263 = vmul.f32 %v1247, %v1247
          %v1264 = vmul.f32 %v1248, %v1248
          %v1265 = vadd.f32 %v1263, %v1264
          %v1266 = vrot.slane %v1265, 4
          %v1267 = vadd.f32 %v1265, %v1266
          %v1268 = vrot.slane %v1267, 2
          %v1269 = vadd.f32 %v1267, %v1268
          %v1270 = vrot.slane %v1269, 1
          %v1271 = vadd.f32 %v1269, %v1270
          %v1272 = vadd.f32 %v1262, %v1271
          %1273 = vst [vmem:[#allocation8] sm:$0x1] %v1272
        $region124: #{tpu_custom_call.1} parent=83 // pred_fallthru
          _
        %p1274 = pnand %p962, %p600
        %p1275 = pneg %p1274
        // Predicated region
        $region125: #{tpu_custom_call.1} parent=83 // pred_check
          _
        $region126: #{tpu_custom_call.1} parent=83 // pred_check_branch
          %1277 = sbr.rel (%p1274) target = $region128
        $region127: #{tpu_custom_call.1} parent=83 // pred_region
          %v1278 = vld [vmem:[#allocation7] sm:$0x1]
          %v1279 = vmul.f32 %v1278, 0.0625
          %v1280 = vld [vmem:[#allocation8] sm:$0x1]
          %v1281 = vmul.f32 %v1280, 0.0625
          %v1282 = vmul.f32 %v1279, %v1279
          %v1283 = vsub.f32 %v1281, %v1282
          %v1284 = vmax.f32 %v1283, 0.0
          %v1285 = vld [vmem:[%s12] sm:$0x1]
          %v1286 = vadd.f32 %v1284, 1e-05
          %v1287 = vrsqrt.pop %v1286
          %v1288 = vmul.f32 %v1285, %v1287
          %v1289 = vld [vmem:[%s13] sm:$0x1]
          %v1290 = vmul.f32 %v1279, %v1288
          %v1291 = vsub.f32 %v1289, %v1290
          %v1292 = vld [vmem:[#allocation4] sm:$0xff]
          %v1293 = vld [vmem:[#allocation4 + $0x8] sm:$0xff]
          %v1295 = vlaneseq
          %v1296 = vshrl.u32 %v1295, 7
          %v1297 = vsub.s32 0, %v1296
          %v1298 = vrot.slane %v1288, %v1297
          %v1300 = vmul.f32 %v1292, %v1298
          %v1301 = vmul.f32 %v1293, %v1298
          %v1303 = vlaneseq
          %v1304 = vshrl.u32 %v1303, 7
          %v1305 = vsub.s32 0, %v1304
          %v1306 = vrot.slane %v1291, %v1305
          %v1308 = vadd.f32 %v1300, %v1306
          %v1309 = vadd.f32 %v1301, %v1306
          %v1310 = vld [vmem:[%s14] sm:$0x1]
          %v1311 = vpack.c.bf16 %v1309, %v1308
          %vm1312 = vcmask 130048
          %v1314 = vsel %vm1312, %v1310, 0
          %1316 = vmatprep.subr.bf16.mxu0 0
          %1317 = vmatpush1.bf16.msra.mxu0 %v1311
          %1318 = vmatprep.subr.bf16.mxu0 0
          %1319 = vmatpush1.bf16.msra.mxu0 0
          %1320 = vmatprep.subr.bf16.mxu0 0
          %1321 = vmatpush1.bf16.msra.mxu0 0
          %1322 = vmatprep.subr.bf16.mxu0 0
          %1323 = vmatpush1.bf16.msra.mxu0 0
          %1324 = vmatprep.subr.bf16.mxu0 0
          %1325 = vmatpush1.bf16.msra.mxu0 0
          %1326 = vmatprep.subr.bf16.mxu0 0
          %1327 = vmatpush1.bf16.msra.mxu0 0
          %1328 = vmatprep.subr.bf16.mxu0 0
          %1329 = vmatpush1.bf16.msra.mxu0 0
          %1330 = vmatprep.subr.bf16.mxu0 0
          %1331 = vmatpush1.bf16.msra.mxu0 0
          %1332 = vmatprep.subr.bf16.mxu0 0
          %1333 = vmatpush1.bf16.msra.mxu0 0
          %1334 = vmatprep.subr.bf16.mxu0 0
          %1335 = vmatpush1.bf16.msra.mxu0 0
          %1336 = vmatprep.subr.bf16.mxu0 0
          %1337 = vmatpush1.bf16.msra.mxu0 0
          %1338 = vmatprep.subr.bf16.mxu0 0
          %1339 = vmatpush1.bf16.msra.mxu0 0
          %1340 = vmatprep.subr.bf16.mxu0 0
          %1341 = vmatpush1.bf16.msra.mxu0 0
          %1342 = vmatprep.subr.bf16.mxu0 0
          %1343 = vmatpush1.bf16.msra.mxu0 0
          %1344 = vmatprep.subr.bf16.mxu0 0
          %1345 = vmatpush1.bf16.msra.mxu0 0
          %1346 = vmatprep.subr.bf16.mxu0 0
          %1347 = vmatpush1.bf16.msra.mxu0 0
          %1348 = vmatprep.mubr.bf16.mxu0 0
          %1349 = vmatmul.mubr.bf16.gmra.mrb[0].mxu0 %v1314
          %v1350 = vpop.f32.mrb[0].mxu0
          %v1351 = vadd.f32 0.0, %v1350
          %v1352 = vpop.f32.mrb[0].mxu0
          %v1353 = vpop.f32.mrb[0].mxu0
          %v1354 = vpop.f32.mrb[0].mxu0
          %1355 = vdwg.mxu0
          %v1356 = vld [vmem:[%s15] sm:$0x3]
          %1358 = vset.pattern.permute.xlu0 0
          %1359 = vperm.xlu0 %1358, %v1356
          %v1360 = vpop.permute.xlu0 %1359
          %v1362 = vmul.f32 %v1351, %v1360
          %1363 = vst [vmem:[#allocation20] sm:$0x3] %v1362
        $region128: #{tpu_custom_call.1} parent=83 // pred_fallthru
          _
        // Predicated region
        $region129: #{tpu_custom_call.1} parent=83 // pred_check
          %p1364 = pneg %p398
        $region130: #{tpu_custom_call.1} parent=83 // pred_check_branch
          %1366 = sbr.rel (%p1364) target = $region132
        $region131: #{tpu_custom_call.1} parent=83 // pred_region
          %s1368 = ssub.s32 32, 32
          %1369 = vsyncadd [#allocation11], %s1368
          %s1371 = sshll.u32 [#allocation20], 4
          %s1372 = int_to_ptr.vmem [resolvable:$true] %s1371
          %1374 = dma.vmem_to_hbm [thread:$0]  %s1372, 32, %s16, [#allocation11]
        $region132: #{tpu_custom_call.1} parent=83 // pred_fallthru
          _
        // Predicated region
        $region133: #{tpu_custom_call.1} parent=83 // pred_check
          %p1375 = pneg %p398
        $region134: #{tpu_custom_call.1} parent=83 // pred_check_branch
          %1377 = sbr.rel (%p1375) target = $region136
        $region135: #{tpu_custom_call.1} parent=83 // pred_region
          %1378 = dma.done [#allocation11], 32
        $region136: #{tpu_custom_call.1} parent=83 // pred_fallthru
          _
      $region84: #{tpu_custom_call.1} parent=5 // pred_fallthru
        _
      %p1379 = scmp.le.s32.totalorder 2, %s27
      // Predicated region
      $region137: #{tpu_custom_call.1} parent=5 // pred_check
        %p1380 = pneg %p1379
      $region138: #{tpu_custom_call.1} parent=5 // pred_check_branch
        %1382 = sbr.rel (%p1380) target = $region140
      $region139: #{tpu_custom_call.1} parent=5 // pred_region
        %s1383 = ssub.s32 %s27, 2
      $region140: #{tpu_custom_call.1} parent=5 // pred_fallthru
        _
    $region6: #{tpu_custom_call.1} parent=1 // loop_footer
      %s31 = sadd.s32 1, %s27
    $region7: #{tpu_custom_call.1} parent=1 // loop_footer_branch
      %26 = sbr.rel target = $region3
    $region8: #{tpu_custom_call.1} parent=1 // loop_exit
      _
    %1384 = vsyncpa [#allocation10], 1
    %s1385 = scalar_lea.sflag [#allocation10], 1
    %1386 = vsyncpa %s1385, 1
    %1387 = vsyncpa [#allocation13], 1
    %1388 = vsyncpa [#allocation16], 1
    %1389 = vsyncpa [#allocation19], 1
    %1390 = vsyncpa [#allocation11], 1
    %s1391 = scalar_lea.sflag [#allocation11], 1
    %1392 = vsyncpa %s1391, 1

</llo_original>
